<compile_context>
chip_gen: v7x
topology: tpu7x:2x2x1
jax: 0.10.0
libtpu: 0.0.40
codegen_flags: <defaults>
</compile_context>

<pallas_src>
import jax
import jax.numpy as jnp
from jax.experimental import pallas as pl
from jax.experimental.pallas import tpu as pltpu

HIDDEN = 256
OUT = 3          # RGB
OUT_PAD = 128    # last matmul zero-padded to a full lane-dense width
OUT_ROWS = 8     # sublane-aligned row count of the transposed output slab


def color_mlp_kernel(x_ref,
                     w1, b1, w2, b2, w3, b3, w4, b4, w5, b5, w6, b6,
                     o_ref):
    cin = x_ref.shape[1]
    # bf16 MXU operands; only the last input channel stays live in f32 (final scale).
    x = x_ref[...].astype(jnp.bfloat16)                  # (tm, Cin) bf16
    x_last = x_ref[:, pl.ds(cin - 1, 1)]                 # (tm, 1)  f32

    def layer(h, w_ref, b_ref):
        # bf16 operands on the MXU, f32 accumulation; bias + ReLU on the f32
        # accumulator (v5e VPU/EUP have no bf16 arithmetic -> keep epilogue f32).
        acc = jnp.dot(h, w_ref[...], preferred_element_type=jnp.float32) + b_ref[...]
        return jnp.maximum(acc, 0.0).astype(jnp.bfloat16)

    h = layer(x, w1, b1)
    h = layer(h, w2, b2)
    h = layer(h, w3, b3)
    h = layer(h, w4, b4)
    h = layer(h, w5, b5)

    out = jnp.dot(h, w6[...], preferred_element_type=jnp.float32) + b6[...]  # (tm, OUT_PAD) f32
    out = out * x_last                                   # forward(): layers(x) * x[..., -1:]

    # Lane-dense, transposed, bf16 store: (tm, 128) -> (128, tm) via the XLU
    # (a free slot in this MXU-bound kernel); keep the first 8 sublanes only.
    o_ref[...] = out.T[:OUT_ROWS, :].astype(o_ref.dtype)


def _round_up(a, m):
    return (a + m - 1) // m * m


def _tpu_caps():
    """(per-core VMEM bytes, TensorCores per chip), with conservative fallbacks."""
    vmem_cap, num_cores = 64 << 20, 1            # conservative default (v7x-sized VMEM)
    try:
        kind = jax.devices()[0].device_kind.lower()
        if "v7" in kind or "tpu7" in kind:
            vmem_cap, num_cores = 64 << 20, 2
        elif "v5p" in kind or "v4" in kind:
            vmem_cap, num_cores = 128 << 20, 2
        elif "v5" in kind or "v6" in kind:       # v5e / v6e: single TC, 128 MiB
            vmem_cap, num_cores = 128 << 20, 1
    except Exception:
        pass
    return vmem_cap, num_cores


def _pick_grid(N, tm_req, num_cores, vmem_cap):
    """Row tile (multiple of 128) + padded row count; VMEM- and megacore-aware."""
    # Rough peak live VMEM per tile row: f32 accumulator (1 KiB) + bf16 activations
    # (1 KiB) + padded f32 output & its transpose (1 KiB) + double-buffered I/O;
    # use a conservative 6 KiB/row against half the physical VMEM so v7x never spills.
    per_row_bytes = 6144
    tm_cap = max(128, (vmem_cap // 2 // per_row_bytes) // 128 * 128)
    tm_eff = min(max(128, _round_up(tm_req, 128)), tm_cap, _round_up(N, 128))
    steps = pl.cdiv(N, tm_eff)
    if num_cores > 1 and N > 128:
        # Keep the step count a multiple of the TensorCore count so the
        # "parallel" grid axis shards evenly (shrink the tile rather than
        # padding an extra tile of wasted rows).
        steps = _round_up(max(steps, num_cores), num_cores)
        tm_eff = min(tm_eff, max(128, _round_up(pl.cdiv(N, steps), 128)))
        steps = _round_up(pl.cdiv(N, tm_eff), num_cores)
    return tm_eff, steps * tm_eff


def color_mlp(x, params, *, tm=4096):
    """x: (..., Cin) float32. params: list of 6 (W, b) with W (in, out), b (out,)/(1, out)."""
    x = jnp.asarray(x, jnp.float32)
    lead, cin = x.shape[:-1], x.shape[-1]
    x2 = x.reshape(-1, cin)
    N = x2.shape[0]

    # bf16 weights (MXU operands), f32 biases (added on the f32 accumulator);
    # last layer zero-padded 3 -> 128 output columns for lane-dense MXU work.
    flat_params = []
    for li, (W, b) in enumerate(params):
        W = jnp.asarray(W, jnp.float32)
        b = jnp.asarray(b, jnp.float32).reshape(1, -1)
        if li == len(params) - 1:
            W = jnp.pad(W, ((0, 0), (0, OUT_PAD - W.shape[1])))
            b = jnp.pad(b, ((0, 0), (0, OUT_PAD - b.shape[1])))
        flat_params.append(W.astype(jnp.bfloat16))
        flat_params.append(b)   # bias stays f32

    vmem_cap, num_cores = _tpu_caps()
    tm_eff, n_pad = _pick_grid(N, tm, num_cores, vmem_cap)
    if n_pad != N:
        x2 = jnp.pad(x2, ((0, n_pad - N), (0, 0)))
    grid = (n_pad // tm_eff,)

    def resident(shape):
        # Whole-array block, same block every step -> stays resident in VMEM.
        # (pl.Buffered(1) would also drop the second ~0.3 MiB buffer; left at the
        #  default for robustness since the saving is negligible here.)
        return pl.BlockSpec(shape, lambda i: (0, 0))

    in_specs = [pl.BlockSpec((tm_eff, cin), lambda i: (i, 0))]
    in_specs += [resident(p.shape) for p in flat_params]
    # Transposed (8, n_pad) bf16 output: lane-dense, unmasked stores, tiny writeback.
    # (If an xprof trace ever shows exposed writeback, add pipeline_mode=pl.Buffered(3).)
    out_spec = pl.BlockSpec((OUT_ROWS, tm_eff), lambda i: (0, i))

    flops = 2 * n_pad * (cin * HIDDEN + 4 * HIDDEN * HIDDEN + HIDDEN * OUT_PAD)
    bytes_accessed = (n_pad * cin * 4
                      + sum(int(p.size) * p.dtype.itemsize for p in flat_params)
                      + n_pad * OUT_ROWS * 2)

    out = pl.pallas_call(
        color_mlp_kernel,
        out_shape=jax.ShapeDtypeStruct((OUT_ROWS, n_pad), jnp.bfloat16),
        grid_spec=pltpu.PrefetchScalarGridSpec(
            num_scalar_prefetch=0,
            grid=grid,
            in_specs=in_specs,
            out_specs=out_spec,
        ),
        compiler_params=pltpu.CompilerParams(
            dimension_semantics=("parallel",),
            vmem_limit_bytes=min(int(vmem_cap) * 3 // 4, 96 << 20),
        ),
        cost_estimate=pl.CostEstimate(
            flops=flops, bytes_accessed=bytes_accessed, transcendentals=0),
    )(x2, *flat_params)

    # Tiny slice/transpose/cast: touches only 3 x N elements (vs. a full HBM pass
    # over an (n_pad, 128) f32 slab in the previous version).
    res = out[:OUT, :N].T.astype(jnp.float32)
    return res.reshape(*lead, OUT)


def init_params(key, in_channels):
    """Deterministic init mirroring the Linear layer shapes in ColorMLP.__init__."""
    sizes = [(in_channels, HIDDEN),
             (HIDDEN, HIDDEN),
             (HIDDEN, HIDDEN),
             (HIDDEN, HIDDEN),
             (HIDDEN, HIDDEN),
             (HIDDEN, OUT)]
    params = []
    for (fan_in, fan_out) in sizes:
        key, kw, kb = jax.random.split(key, 3)
        bound = 1.0 / jnp.sqrt(fan_in)   # PyTorch nn.Linear default uniform bound
        W = jax.random.uniform(kw, (fan_in, fan_out), jnp.float32, -bound, bound)
        b = jax.random.uniform(kb, (1, fan_out), jnp.float32, -bound, bound)
        params.append((W, b))
    return params


def reference_forward(x, params):
    h = x
    for i, (W, b) in enumerate(params):
        h = h @ W + b
        if i < len(params) - 1:
            h = jnp.maximum(h, 0.0)
    return h * x[..., -1:]


# TODO(synk): Adam optimizer state and checkpoint capture/restore from ColorMLP are
# training / I/O machinery, not part of the forward pass, and are not translated.

if __name__ == "__main__":
    key = jax.random.PRNGKey(0)
    in_channels = 4

    key, kx, kp = jax.random.split(key, 3)
    # 2 x 125 = 250 rows: exercises leading-dim flattening and the row-padding path.
    x = jax.random.normal(kx, (2, 125, in_channels), jnp.float32)
    params = init_params(kp, in_channels)

    out = jax.block_until_ready(color_mlp(x, params))
    ref = reference_forward(x, params)

    assert out.shape == (2, 125, OUT)
    # bf16 operand path + bf16 writeback (f32 accumulation) -> loosened tolerance.
    err = float(jnp.max(jnp.abs(out - ref)))
    assert jnp.allclose(out, ref, atol=6e-2, rtol=6e-2), err

    print("KERNEL_OK")
</pallas_src>

<mosaic_0001>
module attributes {stable_mosaic.version = 11 : i64} {
  func.func @color_mlp_kernel(%arg0: i32, %arg1: memref<256x4xf32, #tpu.memory_space<vmem>>, %arg2: memref<4x256xbf16, #tpu.memory_space<vmem>>, %arg3: memref<1x256xf32, #tpu.memory_space<vmem>>, %arg4: memref<256x256xbf16, #tpu.memory_space<vmem>>, %arg5: memref<1x256xf32, #tpu.memory_space<vmem>>, %arg6: memref<256x256xbf16, #tpu.memory_space<vmem>>, %arg7: memref<1x256xf32, #tpu.memory_space<vmem>>, %arg8: memref<256x256xbf16, #tpu.memory_space<vmem>>, %arg9: memref<1x256xf32, #tpu.memory_space<vmem>>, %arg10: memref<256x256xbf16, #tpu.memory_space<vmem>>, %arg11: memref<1x256xf32, #tpu.memory_space<vmem>>, %arg12: memref<256x128xbf16, #tpu.memory_space<vmem>>, %arg13: memref<1x128xf32, #tpu.memory_space<vmem>>, %arg14: memref<8x256xbf16, #tpu.memory_space<vmem>>) attributes {dimension_semantics = [#tpu.dimension_semantics<parallel>], iteration_bounds = array<i64: 1>, scalar_prefetch = 0 : i64, scratch_operands = 0 : i64, tpu.core_type = #tpu.core_type<tc>, window_params = [{transform_indices = @transform_0, window_bounds = array<i64: 256, 4>}, {pipeline_mode = #tpu.pipeline_mode<synchronous>, transform_indices = @transform_1, window_bounds = array<i64: 4, 256>}, {pipeline_mode = #tpu.pipeline_mode<synchronous>, transform_indices = @transform_2, window_bounds = array<i64: 1, 256>}, {pipeline_mode = #tpu.pipeline_mode<synchronous>, transform_indices = @transform_3, window_bounds = array<i64: 256, 256>}, {pipeline_mode = #tpu.pipeline_mode<synchronous>, transform_indices = @transform_4, window_bounds = array<i64: 1, 256>}, {pipeline_mode = #tpu.pipeline_mode<synchronous>, transform_indices = @transform_5, window_bounds = array<i64: 256, 256>}, {pipeline_mode = #tpu.pipeline_mode<synchronous>, transform_indices = @transform_6, window_bounds = array<i64: 1, 256>}, {pipeline_mode = #tpu.pipeline_mode<synchronous>, transform_indices = @transform_7, window_bounds = array<i64: 256, 256>}, {pipeline_mode = #tpu.pipeline_mode<synchronous>, transform_indices = @transform_8, window_bounds = array<i64: 1, 256>}, {pipeline_mode = #tpu.pipeline_mode<synchronous>, transform_indices = @transform_9, window_bounds = array<i64: 256, 256>}, {pipeline_mode = #tpu.pipeline_mode<synchronous>, transform_indices = @transform_10, window_bounds = array<i64: 1, 256>}, {pipeline_mode = #tpu.pipeline_mode<synchronous>, transform_indices = @transform_11, window_bounds = array<i64: 256, 128>}, {pipeline_mode = #tpu.pipeline_mode<synchronous>, transform_indices = @transform_12, window_bounds = array<i64: 1, 128>}, {transform_indices = @transform_13, window_bounds = array<i64: 8, 256>}]} {
    %c0 = arith.constant 0 : index
    %c0_0 = arith.constant 0 : index
    %0 = vector.load %arg1[%c0, %c0_0] : memref<256x4xf32, #tpu.memory_space<vmem>>, vector<256x4xf32>
    %1 = arith.truncf %0 : vector<256x4xf32> to vector<256x4xbf16>
    %c0_1 = arith.constant 0 : index
    %c3 = arith.constant 3 : index
    %2 = vector.load %arg1[%c0_1, %c3] : memref<256x4xf32, #tpu.memory_space<vmem>>, vector<256x1xf32>
    %c0_2 = arith.constant 0 : index
    %c0_3 = arith.constant 0 : index
    %3 = vector.load %arg2[%c0_2, %c0_3] : memref<4x256xbf16, #tpu.memory_space<vmem>>, vector<4x256xbf16>
    %cst = arith.constant dense<0.000000e+00> : vector<256x256xf32>
    %4 = tpu.matmul %1, %3, %cst {dimension_numbers = #tpu.dot_dimension_numbers<[1], [0], [0], [1], [0, 0, 1, 1], [], []>} : vector<256x4xbf16>, vector<4x256xbf16>, vector<256x256xf32> -> vector<256x256xf32>
    %c0_4 = arith.constant 0 : index
    %c0_5 = arith.constant 0 : index
    %5 = vector.load %arg3[%c0_4, %c0_5] : memref<1x256xf32, #tpu.memory_space<vmem>>, vector<1x256xf32>
    %6 = vector.broadcast %5 : vector<1x256xf32> to vector<256x256xf32>
    %7 = arith.addf %4, %6 : vector<256x256xf32>
    %cst_6 = arith.constant 0.000000e+00 : f32
    %8 = vector.broadcast %cst_6 : f32 to vector<256x256xf32>
    %9 = arith.maximumf %7, %8 : vector<256x256xf32>
    %10 = arith.truncf %9 : vector<256x256xf32> to vector<256x256xbf16>
    %c0_7 = arith.constant 0 : index
    %c0_8 = arith.constant 0 : index
    %11 = vector.load %arg4[%c0_7, %c0_8] : memref<256x256xbf16, #tpu.memory_space<vmem>>, vector<256x256xbf16>
    %cst_9 = arith.constant dense<0.000000e+00> : vector<256x256xf32>
    %12 = tpu.matmul %10, %11, %cst_9 {dimension_numbers = #tpu.dot_dimension_numbers<[1], [0], [0], [1], [0, 0, 1, 1], [], []>} : vector<256x256xbf16>, vector<256x256xbf16>, vector<256x256xf32> -> vector<256x256xf32>
    %c0_10 = arith.constant 0 : index
    %c0_11 = arith.constant 0 : index
    %13 = vector.load %arg5[%c0_10, %c0_11] : memref<1x256xf32, #tpu.memory_space<vmem>>, vector<1x256xf32>
    %14 = vector.broadcast %13 : vector<1x256xf32> to vector<256x256xf32>
    %15 = arith.addf %12, %14 : vector<256x256xf32>
    %cst_12 = arith.constant 0.000000e+00 : f32
    %16 = vector.broadcast %cst_12 : f32 to vector<256x256xf32>
    %17 = arith.maximumf %15, %16 : vector<256x256xf32>
    %18 = arith.truncf %17 : vector<256x256xf32> to vector<256x256xbf16>
    %c0_13 = arith.constant 0 : index
    %c0_14 = arith.constant 0 : index
    %19 = vector.load %arg6[%c0_13, %c0_14] : memref<256x256xbf16, #tpu.memory_space<vmem>>, vector<256x256xbf16>
    %cst_15 = arith.constant dense<0.000000e+00> : vector<256x256xf32>
    %20 = tpu.matmul %18, %19, %cst_15 {dimension_numbers = #tpu.dot_dimension_numbers<[1], [0], [0], [1], [0, 0, 1, 1], [], []>} : vector<256x256xbf16>, vector<256x256xbf16>, vector<256x256xf32> -> vector<256x256xf32>
    %c0_16 = arith.constant 0 : index
    %c0_17 = arith.constant 0 : index
    %21 = vector.load %arg7[%c0_16, %c0_17] : memref<1x256xf32, #tpu.memory_space<vmem>>, vector<1x256xf32>
    %22 = vector.broadcast %21 : vector<1x256xf32> to vector<256x256xf32>
    %23 = arith.addf %20, %22 : vector<256x256xf32>
    %cst_18 = arith.constant 0.000000e+00 : f32
    %24 = vector.broadcast %cst_18 : f32 to vector<256x256xf32>
    %25 = arith.maximumf %23, %24 : vector<256x256xf32>
    %26 = arith.truncf %25 : vector<256x256xf32> to vector<256x256xbf16>
    %c0_19 = arith.constant 0 : index
    %c0_20 = arith.constant 0 : index
    %27 = vector.load %arg8[%c0_19, %c0_20] : memref<256x256xbf16, #tpu.memory_space<vmem>>, vector<256x256xbf16>
    %cst_21 = arith.constant dense<0.000000e+00> : vector<256x256xf32>
    %28 = tpu.matmul %26, %27, %cst_21 {dimension_numbers = #tpu.dot_dimension_numbers<[1], [0], [0], [1], [0, 0, 1, 1], [], []>} : vector<256x256xbf16>, vector<256x256xbf16>, vector<256x256xf32> -> vector<256x256xf32>
    %c0_22 = arith.constant 0 : index
    %c0_23 = arith.constant 0 : index
    %29 = vector.load %arg9[%c0_22, %c0_23] : memref<1x256xf32, #tpu.memory_space<vmem>>, vector<1x256xf32>
    %30 = vector.broadcast %29 : vector<1x256xf32> to vector<256x256xf32>
    %31 = arith.addf %28, %30 : vector<256x256xf32>
    %cst_24 = arith.constant 0.000000e+00 : f32
    %32 = vector.broadcast %cst_24 : f32 to vector<256x256xf32>
    %33 = arith.maximumf %31, %32 : vector<256x256xf32>
    %34 = arith.truncf %33 : vector<256x256xf32> to vector<256x256xbf16>
    %c0_25 = arith.constant 0 : index
    %c0_26 = arith.constant 0 : index
    %35 = vector.load %arg10[%c0_25, %c0_26] : memref<256x256xbf16, #tpu.memory_space<vmem>>, vector<256x256xbf16>
    %cst_27 = arith.constant dense<0.000000e+00> : vector<256x256xf32>
    %36 = tpu.matmul %34, %35, %cst_27 {dimension_numbers = #tpu.dot_dimension_numbers<[1], [0], [0], [1], [0, 0, 1, 1], [], []>} : vector<256x256xbf16>, vector<256x256xbf16>, vector<256x256xf32> -> vector<256x256xf32>
    %c0_28 = arith.constant 0 : index
    %c0_29 = arith.constant 0 : index
    %37 = vector.load %arg11[%c0_28, %c0_29] : memref<1x256xf32, #tpu.memory_space<vmem>>, vector<1x256xf32>
    %38 = vector.broadcast %37 : vector<1x256xf32> to vector<256x256xf32>
    %39 = arith.addf %36, %38 : vector<256x256xf32>
    %cst_30 = arith.constant 0.000000e+00 : f32
    %40 = vector.broadcast %cst_30 : f32 to vector<256x256xf32>
    %41 = arith.maximumf %39, %40 : vector<256x256xf32>
    %42 = arith.truncf %41 : vector<256x256xf32> to vector<256x256xbf16>
    %c0_31 = arith.constant 0 : index
    %c0_32 = arith.constant 0 : index
    %43 = vector.load %arg12[%c0_31, %c0_32] : memref<256x128xbf16, #tpu.memory_space<vmem>>, vector<256x128xbf16>
    %cst_33 = arith.constant dense<0.000000e+00> : vector<256x128xf32>
    %44 = tpu.matmul %42, %43, %cst_33 {dimension_numbers = #tpu.dot_dimension_numbers<[1], [0], [0], [1], [0, 0, 1, 1], [], []>} : vector<256x256xbf16>, vector<256x128xbf16>, vector<256x128xf32> -> vector<256x128xf32>
    %c0_34 = arith.constant 0 : index
    %c0_35 = arith.constant 0 : index
    %45 = vector.load %arg13[%c0_34, %c0_35] : memref<1x128xf32, #tpu.memory_space<vmem>>, vector<1x128xf32>
    %46 = vector.broadcast %45 : vector<1x128xf32> to vector<256x128xf32>
    %47 = arith.addf %44, %46 : vector<256x128xf32>
    %48 = vector.broadcast %2 : vector<256x1xf32> to vector<256x128xf32>
    %49 = arith.mulf %47, %48 : vector<256x128xf32>
    %50 = tpu.transpose %49, [1, 0] : vector<256x128xf32> -> vector<128x256xf32>
    %51 = vector.extract_strided_slice %50 {offsets = [0, 0], sizes = [8, 256], strides = [1, 1]} : vector<128x256xf32> to vector<8x256xf32>
    %52 = arith.truncf %51 : vector<8x256xf32> to vector<8x256xbf16>
    %c0_36 = arith.constant 0 : index
    %c0_37 = arith.constant 0 : index
    %53 = vector.load %arg14[%c0_36, %c0_37] : memref<8x256xbf16, #tpu.memory_space<vmem>>, vector<8x256xbf16>
    tpu.vector_store %arg14[%c0_36, %c0_37], %52 {strides = array<i32>} : memref<8x256xbf16, #tpu.memory_space<vmem>>, vector<8x256xbf16>,
    return
  }
  func.func @transform_0(%arg0: i32) -> (i32, i32) {
    %c0_i32 = arith.constant 0 : i32
    %c0_i32_0 = arith.constant 0 : i32
    return %arg0, %c0_i32 : i32, i32
  }
  func.func @transform_1(%arg0: i32) -> (i32, i32) {
    %c0_i32 = arith.constant 0 : i32
    %c0_i32_0 = arith.constant 0 : i32
    %c0_i32_1 = arith.constant 0 : i32
    return %c0_i32, %c0_i32_0 : i32, i32
  }
  func.func @transform_2(%arg0: i32) -> (i32, i32) {
    %c0_i32 = arith.constant 0 : i32
    %c0_i32_0 = arith.constant 0 : i32
    %c0_i32_1 = arith.constant 0 : i32
    return %c0_i32, %c0_i32_0 : i32, i32
  }
  func.func @transform_3(%arg0: i32) -> (i32, i32) {
    %c0_i32 = arith.constant 0 : i32
    %c0_i32_0 = arith.constant 0 : i32
    %c0_i32_1 = arith.constant 0 : i32
    return %c0_i32, %c0_i32_0 : i32, i32
  }
  func.func @transform_4(%arg0: i32) -> (i32, i32) {
    %c0_i32 = arith.constant 0 : i32
    %c0_i32_0 = arith.constant 0 : i32
    %c0_i32_1 = arith.constant 0 : i32
    return %c0_i32, %c0_i32_0 : i32, i32
  }
  func.func @transform_5(%arg0: i32) -> (i32, i32) {
    %c0_i32 = arith.constant 0 : i32
    %c0_i32_0 = arith.constant 0 : i32
    %c0_i32_1 = arith.constant 0 : i32
    return %c0_i32, %c0_i32_0 : i32, i32
  }
  func.func @transform_6(%arg0: i32) -> (i32, i32) {
    %c0_i32 = arith.constant 0 : i32
    %c0_i32_0 = arith.constant 0 : i32
    %c0_i32_1 = arith.constant 0 : i32
    return %c0_i32, %c0_i32_0 : i32, i32
  }
  func.func @transform_7(%arg0: i32) -> (i32, i32) {
    %c0_i32 = arith.constant 0 : i32
    %c0_i32_0 = arith.constant 0 : i32
    %c0_i32_1 = arith.constant 0 : i32
    return %c0_i32, %c0_i32_0 : i32, i32
  }
  func.func @transform_8(%arg0: i32) -> (i32, i32) {
    %c0_i32 = arith.constant 0 : i32
    %c0_i32_0 = arith.constant 0 : i32
    %c0_i32_1 = arith.constant 0 : i32
    return %c0_i32, %c0_i32_0 : i32, i32
  }
  func.func @transform_9(%arg0: i32) -> (i32, i32) {
    %c0_i32 = arith.constant 0 : i32
    %c0_i32_0 = arith.constant 0 : i32
    %c0_i32_1 = arith.constant 0 : i32
    return %c0_i32, %c0_i32_0 : i32, i32
  }
  func.func @transform_10(%arg0: i32) -> (i32, i32) {
    %c0_i32 = arith.constant 0 : i32
    %c0_i32_0 = arith.constant 0 : i32
    %c0_i32_1 = arith.constant 0 : i32
    return %c0_i32, %c0_i32_0 : i32, i32
  }
  func.func @transform_11(%arg0: i32) -> (i32, i32) {
    %c0_i32 = arith.constant 0 : i32
    %c0_i32_0 = arith.constant 0 : i32
    %c0_i32_1 = arith.constant 0 : i32
    return %c0_i32, %c0_i32_0 : i32, i32
  }
  func.func @transform_12(%arg0: i32) -> (i32, i32) {
    %c0_i32 = arith.constant 0 : i32
    %c0_i32_0 = arith.constant 0 : i32
    %c0_i32_1 = arith.constant 0 : i32
    return %c0_i32, %c0_i32_0 : i32, i32
  }
  func.func @transform_13(%arg0: i32) -> (i32, i32) {
    %c0_i32 = arith.constant 0 : i32
    %c0_i32_0 = arith.constant 0 : i32
    return %c0_i32, %arg0 : i32, i32
  }
}

</mosaic_0001>

<llo_original>
// kernel: tpu_custom_call.1
$region0: #{tpu_custom_call.1}
  #allocation0 [shape = 'u32[]', space=smem, size = 0x4, offset = 0x4, fixed_abs, tag = 'smem constant byte address 0x4 - core index']
  #allocation1 [shape = 'u32[144,128]{1,0:T(1,128)}', space=vmem, size = 0x12000, scoped, tag = 'internal scratch']
  %s0 = inlined_call_operand.vmem [shape: f32[256,4], index: 0, kind: input, shape index: {}]
  %s1 = inlined_call_operand.vmem [shape: bf16[4,256], index: 1, kind: input, shape index: {}]
  %s2 = inlined_call_operand.vmem [shape: f32[1,256], index: 2, kind: input, shape index: {}]
  %s3 = inlined_call_operand.vmem [shape: bf16[256,256], index: 3, kind: input, shape index: {}]
  %s4 = inlined_call_operand.vmem [shape: f32[1,256], index: 4, kind: input, shape index: {}]
  %s5 = inlined_call_operand.hbm [shape: bf16[256,256], index: 5, kind: input, shape index: {}]
  %s6 = inlined_call_operand.vmem [shape: f32[1,256], index: 6, kind: input, shape index: {}]
  %s7 = inlined_call_operand.hbm [shape: bf16[256,256], index: 7, kind: input, shape index: {}]
  %s8 = inlined_call_operand.vmem [shape: f32[1,256], index: 8, kind: input, shape index: {}]
  %s9 = inlined_call_operand.hbm [shape: bf16[256,256], index: 9, kind: input, shape index: {}]
  %s10 = inlined_call_operand.vmem [shape: f32[1,256], index: 10, kind: input, shape index: {}]
  %s11 = inlined_call_operand.hbm [shape: bf16[256,128], index: 11, kind: input, shape index: {}]
  %s12 = inlined_call_operand.vmem [shape: f32[1,128], index: 12, kind: input, shape index: {}]
  %s13 = inlined_call_operand.hbm [shape: bf16[8,256], index: 13, kind: output, shape index: {}]
  %s14 = sld [smem:[#allocation0]]
  $region78: #{tpu_custom_call.1} parent=0
    _
  %s16 = ssub.s32 1, %s14
  %s17 = scalar_select 0, %s16, %s14
  $region1: #{tpu_custom_call.1} parent=0
    #allocation2 [shape = 'u8[131072]{0}', space=vmem, size = 0x20000, scoped, tag = 'input window, operand 5, single buffered']
    #allocation3 [shape = 's32[1]{0}', space=sflag, size = 0x4, scoped, tag = 'scoped memory for tpu_custom_call.1']
    #allocation4 [shape = 's32[1]{0}', space=sflag, size = 0x4, scoped, tag = 'scoped memory for tpu_custom_call.1']
    #allocation5 [shape = 'u8[131072]{0}', space=vmem, size = 0x20000, scoped, tag = 'input window, operand 7, single buffered']
    #allocation6 [shape = 's32[1]{0}', space=sflag, size = 0x4, scoped, tag = 'scoped memory for tpu_custom_call.1']
    #allocation7 [shape = 'u8[131072]{0}', space=vmem, size = 0x20000, scoped, tag = 'input window, operand 9, single buffered']
    #allocation8 [shape = 'u8[65536]{0}', space=vmem, size = 0x10000, scoped, tag = 'input window, operand 11, single buffered']
    #allocation9 [shape = 's32[1]{0}', space=sflag, size = 0x4, scoped, tag = 'scoped memory for tpu_custom_call.1']
    #allocation10 [shape = 'u8[4096]{0}', space=vmem, size = 0x1000, scoped, tag = 'output window, operand 0, single buffered']
    %18 = vsyncpa [#allocation3], 0
    %19 = vsyncpa [#allocation6], 0
    %20 = vsyncpa [#allocation9], 0
    %21 = vsyncpa [#allocation4], 0
    // Predicated region
    $region2: #{tpu_custom_call.1} parent=1 // pred_check
      _
    $region3: #{tpu_custom_call.1} parent=1 // pred_check_branch
      %23 = sbr.rel (0) target = $region5
    $region4: #{tpu_custom_call.1} parent=1 // pred_region
      _
    $region5: #{tpu_custom_call.1} parent=1 // pred_fallthru
      _
    // Predicated region
    $region6: #{tpu_custom_call.1} parent=1 // pred_check
      _
    $region7: #{tpu_custom_call.1} parent=1 // pred_check_branch
      %25 = sbr.rel (0) target = $region9
    $region8: #{tpu_custom_call.1} parent=1 // pred_region
      _
    $region9: #{tpu_custom_call.1} parent=1 // pred_fallthru
      _
    // Predicated region
    $region10: #{tpu_custom_call.1} parent=1 // pred_check
      _
    $region11: #{tpu_custom_call.1} parent=1 // pred_check_branch
      %27 = sbr.rel (0) target = $region13
    $region12: #{tpu_custom_call.1} parent=1 // pred_region
      _
    $region13: #{tpu_custom_call.1} parent=1 // pred_fallthru
      _
    // Predicated region
    $region14: #{tpu_custom_call.1} parent=1 // pred_check
      _
    $region15: #{tpu_custom_call.1} parent=1 // pred_check_branch
      %29 = sbr.rel (0) target = $region17
    $region16: #{tpu_custom_call.1} parent=1 // pred_region
      _
    $region17: #{tpu_custom_call.1} parent=1 // pred_fallthru
      _
    // Predicated region
    $region18: #{tpu_custom_call.1} parent=1 // pred_check
      _
    $region19: #{tpu_custom_call.1} parent=1 // pred_check_branch
      %31 = sbr.rel (0) target = $region21
    $region20: #{tpu_custom_call.1} parent=1 // pred_region
      _
    $region21: #{tpu_custom_call.1} parent=1 // pred_fallthru
      _
    // Predicated region
    $region22: #{tpu_custom_call.1} parent=1 // pred_check
      _
    $region23: #{tpu_custom_call.1} parent=1 // pred_check_branch
      %33 = sbr.rel (0) target = $region25
    $region24: #{tpu_custom_call.1} parent=1 // pred_region
      %s35 = ssub.s32 4096, 4096
      %36 = vsyncadd [#allocation3], %s35
      %s37 = sshll.u32 [#allocation2], 4
      %s38 = int_to_ptr.vmem [resolvable:$true] %s37
      %43 = dma.hbm_to_vmem [thread:$0]  %s5, 4096, %s38, [#allocation3], 128, 128, 8
    $region25: #{tpu_custom_call.1} parent=1 // pred_fallthru
      _
    // Predicated region
    $region26: #{tpu_custom_call.1} parent=1 // pred_check
      _
    $region27: #{tpu_custom_call.1} parent=1 // pred_check_branch
      %45 = sbr.rel (0) target = $region29
    $region28: #{tpu_custom_call.1} parent=1 // pred_region
      _
    $region29: #{tpu_custom_call.1} parent=1 // pred_fallthru
      _
    // Predicated region
    $region30: #{tpu_custom_call.1} parent=1 // pred_check
      _
    $region31: #{tpu_custom_call.1} parent=1 // pred_check_branch
      %47 = sbr.rel (0) target = $region33
    $region32: #{tpu_custom_call.1} parent=1 // pred_region
      %s49 = ssub.s32 4096, 4096
      %50 = vsyncadd [#allocation6], %s49
      %s51 = sshll.u32 [#allocation5], 4
      %s52 = int_to_ptr.vmem [resolvable:$true] %s51
      %57 = dma.hbm_to_vmem [thread:$0]  %s7, 4096, %s52, [#allocation6], 128, 128, 8
    $region33: #{tpu_custom_call.1} parent=1 // pred_fallthru
      _
    // Predicated region
    $region34: #{tpu_custom_call.1} parent=1 // pred_check
      _
    $region35: #{tpu_custom_call.1} parent=1 // pred_check_branch
      %59 = sbr.rel (0) target = $region37
    $region36: #{tpu_custom_call.1} parent=1 // pred_region
      _
    $region37: #{tpu_custom_call.1} parent=1 // pred_fallthru
      _
    // Predicated region
    $region38: #{tpu_custom_call.1} parent=1 // pred_check
      _
    $region39: #{tpu_custom_call.1} parent=1 // pred_check_branch
      %61 = sbr.rel (0) target = $region41
    $region40: #{tpu_custom_call.1} parent=1 // pred_region
      %s63 = ssub.s32 4096, 4096
      %64 = vsyncadd [#allocation6], %s63
      %s65 = sshll.u32 [#allocation7], 4
      %s66 = int_to_ptr.vmem [resolvable:$true] %s65
      %71 = dma.hbm_to_vmem [thread:$0]  %s9, 4096, %s66, [#allocation6], 128, 128, 8
    $region41: #{tpu_custom_call.1} parent=1 // pred_fallthru
      _
    // Predicated region
    $region42: #{tpu_custom_call.1} parent=1 // pred_check
      _
    $region43: #{tpu_custom_call.1} parent=1 // pred_check_branch
      %73 = sbr.rel (0) target = $region45
    $region44: #{tpu_custom_call.1} parent=1 // pred_region
      _
    $region45: #{tpu_custom_call.1} parent=1 // pred_fallthru
      _
    // Predicated region
    $region46: #{tpu_custom_call.1} parent=1 // pred_check
      _
    $region47: #{tpu_custom_call.1} parent=1 // pred_check_branch
      %75 = sbr.rel (0) target = $region49
    $region48: #{tpu_custom_call.1} parent=1 // pred_region
      %s77 = ssub.s32 2048, 2048
      %78 = vsyncadd [#allocation9], %s77
      %s79 = sshll.u32 [#allocation8], 4
      %s80 = int_to_ptr.vmem [resolvable:$true] %s79
      %85 = dma.hbm_to_vmem [thread:$0]  %s11, 2048, %s80, [#allocation9], 64, 64, 4
    $region49: #{tpu_custom_call.1} parent=1 // pred_fallthru
      _
    // Predicated region
    $region50: #{tpu_custom_call.1} parent=1 // pred_check
      _
    $region51: #{tpu_custom_call.1} parent=1 // pred_check_branch
      %87 = sbr.rel (0) target = $region53
    $region52: #{tpu_custom_call.1} parent=1 // pred_region
      _
    $region53: #{tpu_custom_call.1} parent=1 // pred_fallthru
      _
    // Predicated region
    $region54: #{tpu_custom_call.1} parent=1 // pred_check
      _
    $region55: #{tpu_custom_call.1} parent=1 // pred_check_branch
      %89 = sbr.rel (0) target = $region57
    $region56: #{tpu_custom_call.1} parent=1 // pred_region
      %90 = dma.done [#allocation3], 4096
    $region57: #{tpu_custom_call.1} parent=1 // pred_fallthru
      _
    // Predicated region
    $region58: #{tpu_custom_call.1} parent=1 // pred_check
      _
    $region59: #{tpu_custom_call.1} parent=1 // pred_check_branch
      %92 = sbr.rel (0) target = $region61
    $region60: #{tpu_custom_call.1} parent=1 // pred_region
      %93 = dma.done [#allocation6], 4096
    $region61: #{tpu_custom_call.1} parent=1 // pred_fallthru
      _
    // Predicated region
    $region62: #{tpu_custom_call.1} parent=1 // pred_check
      _
    $region63: #{tpu_custom_call.1} parent=1 // pred_check_branch
      %95 = sbr.rel (0) target = $region65
    $region64: #{tpu_custom_call.1} parent=1 // pred_region
      %96 = dma.done [#allocation6], 4096
    $region65: #{tpu_custom_call.1} parent=1 // pred_fallthru
      _
    // Predicated region
    $region66: #{tpu_custom_call.1} parent=1 // pred_check
      _
    $region67: #{tpu_custom_call.1} parent=1 // pred_check_branch
      %98 = sbr.rel (0) target = $region69
    $region68: #{tpu_custom_call.1} parent=1 // pred_region
      %99 = dma.done [#allocation9], 2048
    $region69: #{tpu_custom_call.1} parent=1 // pred_fallthru
      _
    %v101 = vld [vmem:[%s0] sm:$0xff]
    %v102 = vld [vmem:[%s0 + $0x8] sm:$0xff]
    %v103 = vld [vmem:[%s0 + $0x10] sm:$0xff]
    %v104 = vld [vmem:[%s0 + $0x18] sm:$0xff]
    %v105 = vld [vmem:[%s0 + $0x20] sm:$0xff]
    %v106 = vld [vmem:[%s0 + $0x28] sm:$0xff]
    %v107 = vld [vmem:[%s0 + $0x30] sm:$0xff]
    %v108 = vld [vmem:[%s0 + $0x38] sm:$0xff]
    %v109 = vld [vmem:[%s0 + $0x40] sm:$0xff]
    %v110 = vld [vmem:[%s0 + $0x48] sm:$0xff]
    %v111 = vld [vmem:[%s0 + $0x50] sm:$0xff]
    %v112 = vld [vmem:[%s0 + $0x58] sm:$0xff]
    %v113 = vld [vmem:[%s0 + $0x60] sm:$0xff]
    %v114 = vld [vmem:[%s0 + $0x68] sm:$0xff]
    %v115 = vld [vmem:[%s0 + $0x70] sm:$0xff]
    %v116 = vld [vmem:[%s0 + $0x78] sm:$0xff]
    %v117 = vld [vmem:[%s0 + $0x80] sm:$0xff]
    %v118 = vld [vmem:[%s0 + $0x88] sm:$0xff]
    %v119 = vld [vmem:[%s0 + $0x90] sm:$0xff]
    %v120 = vld [vmem:[%s0 + $0x98] sm:$0xff]
    %v121 = vld [vmem:[%s0 + $0xa0] sm:$0xff]
    %v122 = vld [vmem:[%s0 + $0xa8] sm:$0xff]
    %v123 = vld [vmem:[%s0 + $0xb0] sm:$0xff]
    %v124 = vld [vmem:[%s0 + $0xb8] sm:$0xff]
    %v125 = vld [vmem:[%s0 + $0xc0] sm:$0xff]
    %v126 = vld [vmem:[%s0 + $0xc8] sm:$0xff]
    %v127 = vld [vmem:[%s0 + $0xd0] sm:$0xff]
    %v128 = vld [vmem:[%s0 + $0xd8] sm:$0xff]
    %v129 = vld [vmem:[%s0 + $0xe0] sm:$0xff]
    %v130 = vld [vmem:[%s0 + $0xe8] sm:$0xff]
    %v131 = vld [vmem:[%s0 + $0xf0] sm:$0xff]
    %v132 = vld [vmem:[%s0 + $0xf8] sm:$0xff]
    %v133 = vpack.c.bf16 %v102, %v101
    %v134 = vpack.c.bf16 %v104, %v103
    %v135 = vpack.c.bf16 %v106, %v105
    %v136 = vpack.c.bf16 %v108, %v107
    %v137 = vpack.c.bf16 %v110, %v109
    %v138 = vpack.c.bf16 %v112, %v111
    %v139 = vpack.c.bf16 %v114, %v113
    %v140 = vpack.c.bf16 %v116, %v115
    %v141 = vpack.c.bf16 %v118, %v117
    %v142 = vpack.c.bf16 %v120, %v119
    %v143 = vpack.c.bf16 %v122, %v121
    %v144 = vpack.c.bf16 %v124, %v123
    %v145 = vpack.c.bf16 %v126, %v125
    %v146 = vpack.c.bf16 %v128, %v127
    %v147 = vpack.c.bf16 %v130, %v129
    %v148 = vpack.c.bf16 %v132, %v131
    %v149 = vld [vmem:[%s1] sm:$0xf]
    %v150 = vld [vmem:[%s2] sm:$0x3]
    %v152 = vlaneseq
    %v153 = vshrl.u32 %v152, 7
    %v154 = vsub.s32 0, %v153
    %v155 = vrot.slane %v150, %v154
    %v156 = vlaneseq
    %v157 = vshrl.u32 %v156, 7
    %v158 = vsub.s32 1, %v157
    %v159 = vrot.slane %v150, %v158
    %v164 = vunpack.c.l.s4 1983009808
    %v165 = vunpack.c.0.s8 %v164
    %v166 = vlaneseq
    %v167 = vshrl.u32 %v166, 7
    %v168 = vsub.s32 %v165, %v167
    %v169 = vrot.slane %v149, %v168
    %v170 = vcombine.high %v169, %v169
    %vm171 = vcmask 31744
    %v173 = vsel %vm171, %v133, 0
    %v176 = vsel %vm171, %v134, 0
    %v179 = vsel %vm171, %v135, 0
    %v182 = vsel %vm171, %v136, 0
    %v185 = vsel %vm171, %v137, 0
    %v188 = vsel %vm171, %v138, 0
    %v191 = vsel %vm171, %v139, 0
    %v194 = vsel %vm171, %v140, 0
    %v197 = vsel %vm171, %v141, 0
    %v200 = vsel %vm171, %v142, 0
    %v203 = vsel %vm171, %v143, 0
    %v206 = vsel %vm171, %v144, 0
    %v209 = vsel %vm171, %v145, 0
    %v212 = vsel %vm171, %v146, 0
    %v215 = vsel %vm171, %v147, 0
    %v218 = vsel %vm171, %v148, 0
    %vm220 = vcmask 1041408
    %v222 = vsel %vm220, %v169, 0
    %v225 = vsel %vm220, %v170, 0
    %227 = vmatprep.subr.bf16.mxu0 %v225
    %228 = vmatpush1.bf16.msra.mxu0 %v222
    %229 = vmatprep.subr.bf16.mxu0 0
    %230 = vmatpush1.bf16.msra.mxu0 0
    %231 = vmatprep.subr.bf16.mxu0 0
    %232 = vmatpush1.bf16.msra.mxu0 0
    %233 = vmatprep.subr.bf16.mxu0 0
    %234 = vmatpush1.bf16.msra.mxu0 0
    %235 = vmatprep.subr.bf16.mxu0 0
    %236 = vmatpush1.bf16.msra.mxu0 0
    %237 = vmatprep.subr.bf16.mxu0 0
    %238 = vmatpush1.bf16.msra.mxu0 0
    %239 = vmatprep.subr.bf16.mxu0 0
    %240 = vmatpush1.bf16.msra.mxu0 0
    %241 = vmatprep.subr.bf16.mxu0 0
    %242 = vmatpush1.bf16.msra.mxu0 0
    %243 = vmatprep.subr.bf16.mxu0 0
    %244 = vmatpush1.bf16.msra.mxu0 0
    %245 = vmatprep.subr.bf16.mxu0 0
    %246 = vmatpush1.bf16.msra.mxu0 0
    %247 = vmatprep.subr.bf16.mxu0 0
    %248 = vmatpush1.bf16.msra.mxu0 0
    %249 = vmatprep.subr.bf16.mxu0 0
    %250 = vmatpush1.bf16.msra.mxu0 0
    %251 = vmatprep.subr.bf16.mxu0 0
    %252 = vmatpush1.bf16.msra.mxu0 0
    %253 = vmatprep.subr.bf16.mxu0 0
    %254 = vmatpush1.bf16.msra.mxu0 0
    %255 = vmatprep.subr.bf16.mxu0 0
    %256 = vmatpush1.bf16.msra.mxu0 0
    %257 = vmatprep.subr.bf16.mxu0 0
    %258 = vmatpush1.bf16.msra.mxu0 0
    %259 = vmatprep.mubr.bf16.mxu0 0
    %260 = vmatmul.mubr.bf16.gmra.mrb[0].mxu0 %v173
    %v261 = vpop.f32.mrb[0].mxu0
    %v262 = vadd.f32 %v155, %v261
    %v263 = vpop.f32.mrb[0].mxu0
    %v264 = vadd.f32 %v159, %v263
    %v265 = vpop.f32.mrb[0].mxu0
    %v266 = vadd.f32 %v155, %v265
    %v267 = vpop.f32.mrb[0].mxu0
    %v268 = vadd.f32 %v159, %v267
    %269 = vmatprep.mubr.bf16.mxu0 0
    %270 = vmatmul.mubr.bf16.gmra.mrb[0].mxu0 %v176
    %v271 = vpop.f32.mrb[0].mxu0
    %v272 = vadd.f32 %v155, %v271
    %v273 = vpop.f32.mrb[0].mxu0
    %v274 = vadd.f32 %v159, %v273
    %v275 = vpop.f32.mrb[0].mxu0
    %v276 = vadd.f32 %v155, %v275
    %v277 = vpop.f32.mrb[0].mxu0
    %v278 = vadd.f32 %v159, %v277
    %279 = vmatprep.mubr.bf16.mxu0 0
    %280 = vmatmul.mubr.bf16.gmra.mrb[0].mxu0 %v179
    %v281 = vpop.f32.mrb[0].mxu0
    %v282 = vadd.f32 %v155, %v281
    %v283 = vpop.f32.mrb[0].mxu0
    %v284 = vadd.f32 %v159, %v283
    %v285 = vpop.f32.mrb[0].mxu0
    %v286 = vadd.f32 %v155, %v285
    %v287 = vpop.f32.mrb[0].mxu0
    %v288 = vadd.f32 %v159, %v287
    %289 = vmatprep.mubr.bf16.mxu0 0
    %290 = vmatmul.mubr.bf16.gmra.mrb[0].mxu0 %v182
    %v291 = vpop.f32.mrb[0].mxu0
    %v292 = vadd.f32 %v155, %v291
    %v293 = vpop.f32.mrb[0].mxu0
    %v294 = vadd.f32 %v159, %v293
    %v295 = vpop.f32.mrb[0].mxu0
    %v296 = vadd.f32 %v155, %v295
    %v297 = vpop.f32.mrb[0].mxu0
    %v298 = vadd.f32 %v159, %v297
    %299 = vmatprep.mubr.bf16.mxu0 0
    %300 = vmatmul.mubr.bf16.gmra.mrb[0].mxu0 %v185
    %v301 = vpop.f32.mrb[0].mxu0
    %v302 = vadd.f32 %v155, %v301
    %v303 = vpop.f32.mrb[0].mxu0
    %v304 = vadd.f32 %v159, %v303
    %v305 = vpop.f32.mrb[0].mxu0
    %v306 = vadd.f32 %v155, %v305
    %v307 = vpop.f32.mrb[0].mxu0
    %v308 = vadd.f32 %v159, %v307
    %309 = vmatprep.mubr.bf16.mxu0 0
    %310 = vmatmul.mubr.bf16.gmra.mrb[0].mxu0 %v188
    %v311 = vpop.f32.mrb[0].mxu0
    %v312 = vadd.f32 %v155, %v311
    %v313 = vpop.f32.mrb[0].mxu0
    %v314 = vadd.f32 %v159, %v313
    %v315 = vpop.f32.mrb[0].mxu0
    %v316 = vadd.f32 %v155, %v315
    %v317 = vpop.f32.mrb[0].mxu0
    %v318 = vadd.f32 %v159, %v317
    %319 = vmatprep.mubr.bf16.mxu0 0
    %320 = vmatmul.mubr.bf16.gmra.mrb[0].mxu0 %v191
    %v321 = vpop.f32.mrb[0].mxu0
    %v322 = vadd.f32 %v155, %v321
    %v323 = vpop.f32.mrb[0].mxu0
    %v324 = vadd.f32 %v159, %v323
    %v325 = vpop.f32.mrb[0].mxu0
    %v326 = vadd.f32 %v155, %v325
    %v327 = vpop.f32.mrb[0].mxu0
    %v328 = vadd.f32 %v159, %v327
    %329 = vmatprep.mubr.bf16.mxu0 0
    %330 = vmatmul.mubr.bf16.gmra.mrb[0].mxu0 %v194
    %v331 = vpop.f32.mrb[0].mxu0
    %v332 = vadd.f32 %v155, %v331
    %v333 = vpop.f32.mrb[0].mxu0
    %v334 = vadd.f32 %v159, %v333
    %v335 = vpop.f32.mrb[0].mxu0
    %v336 = vadd.f32 %v155, %v335
    %v337 = vpop.f32.mrb[0].mxu0
    %v338 = vadd.f32 %v159, %v337
    %339 = vmatprep.mubr.bf16.mxu0 0
    %340 = vmatmul.mubr.bf16.gmra.mrb[0].mxu0 %v197
    %v341 = vpop.f32.mrb[0].mxu0
    %v342 = vadd.f32 %v155, %v341
    %v343 = vpop.f32.mrb[0].mxu0
    %v344 = vadd.f32 %v159, %v343
    %v345 = vpop.f32.mrb[0].mxu0
    %v346 = vadd.f32 %v155, %v345
    %v347 = vpop.f32.mrb[0].mxu0
    %v348 = vadd.f32 %v159, %v347
    %349 = vmatprep.mubr.bf16.mxu0 0
    %350 = vmatmul.mubr.bf16.gmra.mrb[0].mxu0 %v200
    %v351 = vpop.f32.mrb[0].mxu0
    %v352 = vadd.f32 %v155, %v351
    %v353 = vpop.f32.mrb[0].mxu0
    %v354 = vadd.f32 %v159, %v353
    %v355 = vpop.f32.mrb[0].mxu0
    %v356 = vadd.f32 %v155, %v355
    %v357 = vpop.f32.mrb[0].mxu0
    %v358 = vadd.f32 %v159, %v357
    %359 = vmatprep.mubr.bf16.mxu0 0
    %360 = vmatmul.mubr.bf16.gmra.mrb[0].mxu0 %v203
    %v361 = vpop.f32.mrb[0].mxu0
    %v362 = vadd.f32 %v155, %v361
    %v363 = vpop.f32.mrb[0].mxu0
    %v364 = vadd.f32 %v159, %v363
    %v365 = vpop.f32.mrb[0].mxu0
    %v366 = vadd.f32 %v155, %v365
    %v367 = vpop.f32.mrb[0].mxu0
    %v368 = vadd.f32 %v159, %v367
    %369 = vmatprep.mubr.bf16.mxu0 0
    %370 = vmatmul.mubr.bf16.gmra.mrb[0].mxu0 %v206
    %v371 = vpop.f32.mrb[0].mxu0
    %v372 = vadd.f32 %v155, %v371
    %v373 = vpop.f32.mrb[0].mxu0
    %v374 = vadd.f32 %v159, %v373
    %v375 = vpop.f32.mrb[0].mxu0
    %v376 = vadd.f32 %v155, %v375
    %v377 = vpop.f32.mrb[0].mxu0
    %v378 = vadd.f32 %v159, %v377
    %379 = vmatprep.mubr.bf16.mxu0 0
    %380 = vmatmul.mubr.bf16.gmra.mrb[0].mxu0 %v209
    %v381 = vpop.f32.mrb[0].mxu0
    %v382 = vadd.f32 %v155, %v381
    %v383 = vpop.f32.mrb[0].mxu0
    %v384 = vadd.f32 %v159, %v383
    %v385 = vpop.f32.mrb[0].mxu0
    %v386 = vadd.f32 %v155, %v385
    %v387 = vpop.f32.mrb[0].mxu0
    %v388 = vadd.f32 %v159, %v387
    %389 = vmatprep.mubr.bf16.mxu0 0
    %390 = vmatmul.mubr.bf16.gmra.mrb[0].mxu0 %v212
    %v391 = vpop.f32.mrb[0].mxu0
    %v392 = vadd.f32 %v155, %v391
    %v393 = vpop.f32.mrb[0].mxu0
    %v394 = vadd.f32 %v159, %v393
    %v395 = vpop.f32.mrb[0].mxu0
    %v396 = vadd.f32 %v155, %v395
    %v397 = vpop.f32.mrb[0].mxu0
    %v398 = vadd.f32 %v159, %v397
    %399 = vmatprep.mubr.bf16.mxu0 0
    %400 = vmatmul.mubr.bf16.gmra.mrb[0].mxu0 %v215
    %v401 = vpop.f32.mrb[0].mxu0
    %v402 = vadd.f32 %v155, %v401
    %v403 = vpop.f32.mrb[0].mxu0
    %v404 = vadd.f32 %v159, %v403
    %v405 = vpop.f32.mrb[0].mxu0
    %v406 = vadd.f32 %v155, %v405
    %v407 = vpop.f32.mrb[0].mxu0
    %v408 = vadd.f32 %v159, %v407
    %409 = vmatprep.mubr.bf16.mxu0 0
    %410 = vmatmul.mubr.bf16.gmra.mrb[0].mxu0 %v218
    %v411 = vpop.f32.mrb[0].mxu0
    %v412 = vadd.f32 %v155, %v411
    %v413 = vpop.f32.mrb[0].mxu0
    %v414 = vadd.f32 %v159, %v413
    %v415 = vpop.f32.mrb[0].mxu0
    %v416 = vadd.f32 %v155, %v415
    %v417 = vpop.f32.mrb[0].mxu0
    %v418 = vadd.f32 %v159, %v417
    %419 = vdwg.mxu0
    %v420 = vmax.f32 %v262, 0.0
    %v421 = vmax.f32 %v264, 0.0
    %v422 = vmax.f32 %v266, 0.0
    %v423 = vmax.f32 %v268, 0.0
    %v424 = vmax.f32 %v272, 0.0
    %v425 = vmax.f32 %v274, 0.0
    %v426 = vmax.f32 %v276, 0.0
    %v427 = vmax.f32 %v278, 0.0
    %v428 = vmax.f32 %v282, 0.0
    %v429 = vmax.f32 %v284, 0.0
    %v430 = vmax.f32 %v286, 0.0
    %v431 = vmax.f32 %v288, 0.0
    %v432 = vmax.f32 %v292, 0.0
    %v433 = vmax.f32 %v294, 0.0
    %v434 = vmax.f32 %v296, 0.0
    %v435 = vmax.f32 %v298, 0.0
    %v436 = vmax.f32 %v302, 0.0
    %v437 = vmax.f32 %v304, 0.0
    %v438 = vmax.f32 %v306, 0.0
    %v439 = vmax.f32 %v308, 0.0
    %v440 = vmax.f32 %v312, 0.0
    %v441 = vmax.f32 %v314, 0.0
    %v442 = vmax.f32 %v316, 0.0
    %v443 = vmax.f32 %v318, 0.0
    %v444 = vmax.f32 %v322, 0.0
    %v445 = vmax.f32 %v324, 0.0
    %v446 = vmax.f32 %v326, 0.0
    %v447 = vmax.f32 %v328, 0.0
    %v448 = vmax.f32 %v332, 0.0
    %v449 = vmax.f32 %v334, 0.0
    %v450 = vmax.f32 %v336, 0.0
    %v451 = vmax.f32 %v338, 0.0
    %v452 = vmax.f32 %v342, 0.0
    %v453 = vmax.f32 %v344, 0.0
    %v454 = vmax.f32 %v346, 0.0
    %v455 = vmax.f32 %v348, 0.0
    %v456 = vmax.f32 %v352, 0.0
    %v457 = vmax.f32 %v354, 0.0
    %v458 = vmax.f32 %v356, 0.0
    %v459 = vmax.f32 %v358, 0.0
    %v460 = vmax.f32 %v362, 0.0
    %v461 = vmax.f32 %v364, 0.0
    %v462 = vmax.f32 %v366, 0.0
    %v463 = vmax.f32 %v368, 0.0
    %v464 = vmax.f32 %v372, 0.0
    %v465 = vmax.f32 %v374, 0.0
    %v466 = vmax.f32 %v376, 0.0
    %v467 = vmax.f32 %v378, 0.0
    %v468 = vmax.f32 %v382, 0.0
    %v469 = vmax.f32 %v384, 0.0
    %v470 = vmax.f32 %v386, 0.0
    %v471 = vmax.f32 %v388, 0.0
    %v472 = vmax.f32 %v392, 0.0
    %v473 = vmax.f32 %v394, 0.0
    %v474 = vmax.f32 %v396, 0.0
    %v475 = vmax.f32 %v398, 0.0
    %v476 = vmax.f32 %v402, 0.0
    %v477 = vmax.f32 %v404, 0.0
    %v478 = vmax.f32 %v406, 0.0
    %v479 = vmax.f32 %v408, 0.0
    %v480 = vmax.f32 %v412, 0.0
    %v481 = vmax.f32 %v414, 0.0
    %v482 = vmax.f32 %v416, 0.0
    %v483 = vmax.f32 %v418, 0.0
    %v484 = vpack.c.bf16 %v422, %v420
    %v485 = vpack.c.bf16 %v423, %v421
    %v486 = vpack.c.bf16 %v426, %v424
    %v487 = vpack.c.bf16 %v427, %v425
    %v488 = vpack.c.bf16 %v430, %v428
    %v489 = vpack.c.bf16 %v431, %v429
    %v490 = vpack.c.bf16 %v434, %v432
    %v491 = vpack.c.bf16 %v435, %v433
    %v492 = vpack.c.bf16 %v438, %v436
    %v493 = vpack.c.bf16 %v439, %v437
    %v494 = vpack.c.bf16 %v442, %v440
    %v495 = vpack.c.bf16 %v443, %v441
    %v496 = vpack.c.bf16 %v446, %v444
    %v497 = vpack.c.bf16 %v447, %v445
    %v498 = vpack.c.bf16 %v450, %v448
    %v499 = vpack.c.bf16 %v451, %v449
    %v500 = vpack.c.bf16 %v454, %v452
    %v501 = vpack.c.bf16 %v455, %v453
    %v502 = vpack.c.bf16 %v458, %v456
    %v503 = vpack.c.bf16 %v459, %v457
    %v504 = vpack.c.bf16 %v462, %v460
    %v505 = vpack.c.bf16 %v463, %v461
    %v506 = vpack.c.bf16 %v466, %v464
    %v507 = vpack.c.bf16 %v467, %v465
    %v508 = vpack.c.bf16 %v470, %v468
    %v509 = vpack.c.bf16 %v471, %v469
    %v510 = vpack.c.bf16 %v474, %v472
    %v511 = vpack.c.bf16 %v475, %v473
    %v512 = vpack.c.bf16 %v478, %v476
    %v513 = vpack.c.bf16 %v479, %v477
    %v514 = vpack.c.bf16 %v482, %v480
    %v515 = vpack.c.bf16 %v483, %v481
    %v516 = vld [vmem:[%s3] sm:$0xff]
    %v517 = vld [vmem:[%s3 + $0x8] sm:$0xff]
    %v518 = vld [vmem:[%s3 + $0x10] sm:$0xff]
    %v519 = vld [vmem:[%s3 + $0x18] sm:$0xff]
    %v520 = vld [vmem:[%s3 + $0x20] sm:$0xff]
    %v521 = vld [vmem:[%s3 + $0x28] sm:$0xff]
    %v522 = vld [vmem:[%s3 + $0x30] sm:$0xff]
    %v523 = vld [vmem:[%s3 + $0x38] sm:$0xff]
    %v524 = vld [vmem:[%s3 + $0x40] sm:$0xff]
    %v525 = vld [vmem:[%s3 + $0x48] sm:$0xff]
    %v526 = vld [vmem:[%s3 + $0x50] sm:$0xff]
    %v527 = vld [vmem:[%s3 + $0x58] sm:$0xff]
    %v528 = vld [vmem:[%s3 + $0x60] sm:$0xff]
    %v529 = vld [vmem:[%s3 + $0x68] sm:$0xff]
    %v530 = vld [vmem:[%s3 + $0x70] sm:$0xff]
    %v531 = vld [vmem:[%s3 + $0x78] sm:$0xff]
    %v532 = vld [vmem:[%s3 + $0x80] sm:$0xff]
    %v533 = vld [vmem:[%s3 + $0x88] sm:$0xff]
    %v534 = vld [vmem:[%s3 + $0x90] sm:$0xff]
    %v535 = vld [vmem:[%s3 + $0x98] sm:$0xff]
    %v536 = vld [vmem:[%s3 + $0xa0] sm:$0xff]
    %v537 = vld [vmem:[%s3 + $0xa8] sm:$0xff]
    %v538 = vld [vmem:[%s3 + $0xb0] sm:$0xff]
    %v539 = vld [vmem:[%s3 + $0xb8] sm:$0xff]
    %v540 = vld [vmem:[%s3 + $0xc0] sm:$0xff]
    %v541 = vld [vmem:[%s3 + $0xc8] sm:$0xff]
    %v542 = vld [vmem:[%s3 + $0xd0] sm:$0xff]
    %v543 = vld [vmem:[%s3 + $0xd8] sm:$0xff]
    %v544 = vld [vmem:[%s3 + $0xe0] sm:$0xff]
    %v545 = vld [vmem:[%s3 + $0xe8] sm:$0xff]
    %v546 = vld [vmem:[%s3 + $0xf0] sm:$0xff]
    %v547 = vld [vmem:[%s3 + $0xf8] sm:$0xff]
    %v548 = vld [vmem:[%s4] sm:$0x3]
    %v550 = vlaneseq
    %v551 = vshrl.u32 %v550, 7
    %v552 = vsub.s32 0, %v551
    %v553 = vrot.slane %v548, %v552
    %v554 = vlaneseq
    %v555 = vshrl.u32 %v554, 7
    %v556 = vsub.s32 1, %v555
    %v557 = vrot.slane %v548, %v556
    %v592 = vunpack.c.l.b16 %v516
    %v593 = vunpack.c.h.b16 %v516
    %v594 = vunpack.c.l.b16 %v517
    %v595 = vunpack.c.h.b16 %v517
    %v596 = vunpack.c.l.b16 %v518
    %v597 = vunpack.c.h.b16 %v518
    %v598 = vunpack.c.l.b16 %v519
    %v599 = vunpack.c.h.b16 %v519
    %v600 = vunpack.c.l.b16 %v520
    %v601 = vunpack.c.h.b16 %v520
    %v602 = vunpack.c.l.b16 %v521
    %v603 = vunpack.c.h.b16 %v521
    %v604 = vunpack.c.l.b16 %v522
    %v605 = vunpack.c.h.b16 %v522
    %v606 = vunpack.c.l.b16 %v523
    %v607 = vunpack.c.h.b16 %v523
    %v608 = vunpack.c.l.b16 %v524
    %v609 = vunpack.c.h.b16 %v524
    %v610 = vunpack.c.l.b16 %v525
    %v611 = vunpack.c.h.b16 %v525
    %v612 = vunpack.c.l.b16 %v526
    %v613 = vunpack.c.h.b16 %v526
    %v614 = vunpack.c.l.b16 %v527
    %v615 = vunpack.c.h.b16 %v527
    %v616 = vunpack.c.l.b16 %v528
    %v617 = vunpack.c.h.b16 %v528
    %v618 = vunpack.c.l.b16 %v529
    %v619 = vunpack.c.h.b16 %v529
    %v620 = vunpack.c.l.b16 %v530
    %v621 = vunpack.c.h.b16 %v530
    %v622 = vunpack.c.l.b16 %v531
    %v623 = vunpack.c.h.b16 %v531
    %v624 = vunpack.c.l.b16 %v532
    %v625 = vunpack.c.h.b16 %v532
    %v626 = vunpack.c.l.b16 %v533
    %v627 = vunpack.c.h.b16 %v533
    %v628 = vunpack.c.l.b16 %v534
    %v629 = vunpack.c.h.b16 %v534
    %v630 = vunpack.c.l.b16 %v535
    %v631 = vunpack.c.h.b16 %v535
    %v632 = vunpack.c.l.b16 %v536
    %v633 = vunpack.c.h.b16 %v536
    %v634 = vunpack.c.l.b16 %v537
    %v635 = vunpack.c.h.b16 %v537
    %v636 = vunpack.c.l.b16 %v538
    %v637 = vunpack.c.h.b16 %v538
    %v638 = vunpack.c.l.b16 %v539
    %v639 = vunpack.c.h.b16 %v539
    %v640 = vunpack.c.l.b16 %v540
    %v641 = vunpack.c.h.b16 %v540
    %v642 = vunpack.c.l.b16 %v541
    %v643 = vunpack.c.h.b16 %v541
    %v644 = vunpack.c.l.b16 %v542
    %v645 = vunpack.c.h.b16 %v542
    %v646 = vunpack.c.l.b16 %v543
    %v647 = vunpack.c.h.b16 %v543
    %v648 = vunpack.c.l.b16 %v544
    %v649 = vunpack.c.h.b16 %v544
    %v650 = vunpack.c.l.b16 %v545
    %v651 = vunpack.c.h.b16 %v545
    %v652 = vunpack.c.l.b16 %v546
    %v653 = vunpack.c.h.b16 %v546
    %v654 = vunpack.c.l.b16 %v547
    %v655 = vunpack.c.h.b16 %v547
    %v656 = vpack.c.b16 %v594, %v592
    %v657 = vpack.c.b16 %v595, %v593
    %v658 = vpack.c.b16 %v598, %v596
    %v659 = vpack.c.b16 %v599, %v597
    %v660 = vpack.c.b16 %v602, %v600
    %v661 = vpack.c.b16 %v603, %v601
    %v662 = vpack.c.b16 %v606, %v604
    %v663 = vpack.c.b16 %v607, %v605
    %v664 = vpack.c.b16 %v610, %v608
    %v665 = vpack.c.b16 %v611, %v609
    %v666 = vpack.c.b16 %v614, %v612
    %v667 = vpack.c.b16 %v615, %v613
    %v668 = vpack.c.b16 %v618, %v616
    %v669 = vpack.c.b16 %v619, %v617
    %v670 = vpack.c.b16 %v622, %v620
    %v671 = vpack.c.b16 %v623, %v621
    %v672 = vpack.c.b16 %v626, %v624
    %v673 = vpack.c.b16 %v627, %v625
    %v674 = vpack.c.b16 %v630, %v628
    %v675 = vpack.c.b16 %v631, %v629
    %v676 = vpack.c.b16 %v634, %v632
    %v677 = vpack.c.b16 %v635, %v633
    %v678 = vpack.c.b16 %v638, %v636
    %v679 = vpack.c.b16 %v639, %v637
    %v680 = vpack.c.b16 %v642, %v640
    %v681 = vpack.c.b16 %v643, %v641
    %v682 = vpack.c.b16 %v646, %v644
    %v683 = vpack.c.b16 %v647, %v645
    %v684 = vpack.c.b16 %v650, %v648
    %v685 = vpack.c.b16 %v651, %v649
    %v686 = vpack.c.b16 %v654, %v652
    %v687 = vpack.c.b16 %v655, %v653
    %720 = vmatprep.subr.bf16.mxu0 %v657
    %721 = vmatpush1.bf16.msra.mxu0 %v656
    %722 = vmatprep.subr.bf16.mxu0 %v659
    %723 = vmatpush1.bf16.msra.mxu0 %v658
    %724 = vmatprep.subr.bf16.mxu0 %v661
    %725 = vmatpush1.bf16.msra.mxu0 %v660
    %726 = vmatprep.subr.bf16.mxu0 %v663
    %727 = vmatpush1.bf16.msra.mxu0 %v662
    %728 = vmatprep.subr.bf16.mxu0 %v665
    %729 = vmatpush1.bf16.msra.mxu0 %v664
    %730 = vmatprep.subr.bf16.mxu0 %v667
    %731 = vmatpush1.bf16.msra.mxu0 %v666
    %732 = vmatprep.subr.bf16.mxu0 %v669
    %733 = vmatpush1.bf16.msra.mxu0 %v668
    %734 = vmatprep.subr.bf16.mxu0 %v671
    %735 = vmatpush1.bf16.msra.mxu0 %v670
    %736 = vmatprep.subr.bf16.mxu0 %v673
    %737 = vmatpush1.bf16.msra.mxu0 %v672
    %738 = vmatprep.subr.bf16.mxu0 %v675
    %739 = vmatpush1.bf16.msra.mxu0 %v674
    %740 = vmatprep.subr.bf16.mxu0 %v677
    %741 = vmatpush1.bf16.msra.mxu0 %v676
    %742 = vmatprep.subr.bf16.mxu0 %v679
    %743 = vmatpush1.bf16.msra.mxu0 %v678
    %744 = vmatprep.subr.bf16.mxu0 %v681
    %745 = vmatpush1.bf16.msra.mxu0 %v680
    %746 = vmatprep.subr.bf16.mxu0 %v683
    %747 = vmatpush1.bf16.msra.mxu0 %v682
    %748 = vmatprep.subr.bf16.mxu0 %v685
    %749 = vmatpush1.bf16.msra.mxu0 %v684
    %750 = vmatprep.subr.bf16.mxu0 %v687
    %751 = vmatpush1.bf16.msra.mxu0 %v686
    %752 = vmatprep.mubr.bf16.mxu0 %v485
    %753 = vmatmul.mubr.bf16.gmra.mrb[0].mxu0 %v484
    %v754 = vpop.f32.mrb[0].mxu0
    %v755 = vadd.f32 %v553, %v754
    %v756 = vpop.f32.mrb[0].mxu0
    %v757 = vadd.f32 %v557, %v756
    %v758 = vpop.f32.mrb[0].mxu0
    %v759 = vadd.f32 %v553, %v758
    %v760 = vpop.f32.mrb[0].mxu0
    %v761 = vadd.f32 %v557, %v760
    %762 = vmatprep.mubr.bf16.mxu0 %v487
    %763 = vmatmul.mubr.bf16.gmra.mrb[0].mxu0 %v486
    %v764 = vpop.f32.mrb[0].mxu0
    %v765 = vadd.f32 %v553, %v764
    %v766 = vpop.f32.mrb[0].mxu0
    %v767 = vadd.f32 %v557, %v766
    %v768 = vpop.f32.mrb[0].mxu0
    %v769 = vadd.f32 %v553, %v768
    %v770 = vpop.f32.mrb[0].mxu0
    %v771 = vadd.f32 %v557, %v770
    %772 = vmatprep.mubr.bf16.mxu0 %v489
    %773 = vmatmul.mubr.bf16.gmra.mrb[0].mxu0 %v488
    %v774 = vpop.f32.mrb[0].mxu0
    %v775 = vadd.f32 %v553, %v774
    %v776 = vpop.f32.mrb[0].mxu0
    %v777 = vadd.f32 %v557, %v776
    %v778 = vpop.f32.mrb[0].mxu0
    %v779 = vadd.f32 %v553, %v778
    %v780 = vpop.f32.mrb[0].mxu0
    %v781 = vadd.f32 %v557, %v780
    %782 = vmatprep.mubr.bf16.mxu0 %v491
    %783 = vmatmul.mubr.bf16.gmra.mrb[0].mxu0 %v490
    %v784 = vpop.f32.mrb[0].mxu0
    %v785 = vadd.f32 %v553, %v784
    %v786 = vpop.f32.mrb[0].mxu0
    %v787 = vadd.f32 %v557, %v786
    %v788 = vpop.f32.mrb[0].mxu0
    %v789 = vadd.f32 %v553, %v788
    %v790 = vpop.f32.mrb[0].mxu0
    %v791 = vadd.f32 %v557, %v790
    %792 = vmatprep.mubr.bf16.mxu0 %v493
    %793 = vmatmul.mubr.bf16.gmra.mrb[0].mxu0 %v492
    %v794 = vpop.f32.mrb[0].mxu0
    %v795 = vadd.f32 %v553, %v794
    %v796 = vpop.f32.mrb[0].mxu0
    %v797 = vadd.f32 %v557, %v796
    %v798 = vpop.f32.mrb[0].mxu0
    %v799 = vadd.f32 %v553, %v798
    %v800 = vpop.f32.mrb[0].mxu0
    %v801 = vadd.f32 %v557, %v800
    %802 = vmatprep.mubr.bf16.mxu0 %v495
    %803 = vmatmul.mubr.bf16.gmra.mrb[0].mxu0 %v494
    %v804 = vpop.f32.mrb[0].mxu0
    %v805 = vadd.f32 %v553, %v804
    %v806 = vpop.f32.mrb[0].mxu0
    %v807 = vadd.f32 %v557, %v806
    %v808 = vpop.f32.mrb[0].mxu0
    %v809 = vadd.f32 %v553, %v808
    %v810 = vpop.f32.mrb[0].mxu0
    %v811 = vadd.f32 %v557, %v810
    %812 = vmatprep.mubr.bf16.mxu0 %v497
    %813 = vmatmul.mubr.bf16.gmra.mrb[0].mxu0 %v496
    %v814 = vpop.f32.mrb[0].mxu0
    %v815 = vadd.f32 %v553, %v814
    %v816 = vpop.f32.mrb[0].mxu0
    %v817 = vadd.f32 %v557, %v816
    %v818 = vpop.f32.mrb[0].mxu0
    %v819 = vadd.f32 %v553, %v818
    %v820 = vpop.f32.mrb[0].mxu0
    %v821 = vadd.f32 %v557, %v820
    %822 = vmatprep.mubr.bf16.mxu0 %v499
    %823 = vmatmul.mubr.bf16.gmra.mrb[0].mxu0 %v498
    %v824 = vpop.f32.mrb[0].mxu0
    %v825 = vadd.f32 %v553, %v824
    %v826 = vpop.f32.mrb[0].mxu0
    %v827 = vadd.f32 %v557, %v826
    %v828 = vpop.f32.mrb[0].mxu0
    %v829 = vadd.f32 %v553, %v828
    %v830 = vpop.f32.mrb[0].mxu0
    %v831 = vadd.f32 %v557, %v830
    %832 = vmatprep.mubr.bf16.mxu0 %v501
    %833 = vmatmul.mubr.bf16.gmra.mrb[0].mxu0 %v500
    %v834 = vpop.f32.mrb[0].mxu0
    %v835 = vadd.f32 %v553, %v834
    %v836 = vpop.f32.mrb[0].mxu0
    %v837 = vadd.f32 %v557, %v836
    %v838 = vpop.f32.mrb[0].mxu0
    %v839 = vadd.f32 %v553, %v838
    %v840 = vpop.f32.mrb[0].mxu0
    %v841 = vadd.f32 %v557, %v840
    %842 = vmatprep.mubr.bf16.mxu0 %v503
    %843 = vmatmul.mubr.bf16.gmra.mrb[0].mxu0 %v502
    %v844 = vpop.f32.mrb[0].mxu0
    %v845 = vadd.f32 %v553, %v844
    %v846 = vpop.f32.mrb[0].mxu0
    %v847 = vadd.f32 %v557, %v846
    %v848 = vpop.f32.mrb[0].mxu0
    %v849 = vadd.f32 %v553, %v848
    %v850 = vpop.f32.mrb[0].mxu0
    %v851 = vadd.f32 %v557, %v850
    %852 = vmatprep.mubr.bf16.mxu0 %v505
    %853 = vmatmul.mubr.bf16.gmra.mrb[0].mxu0 %v504
    %v854 = vpop.f32.mrb[0].mxu0
    %v855 = vadd.f32 %v553, %v854
    %v856 = vpop.f32.mrb[0].mxu0
    %v857 = vadd.f32 %v557, %v856
    %v858 = vpop.f32.mrb[0].mxu0
    %v859 = vadd.f32 %v553, %v858
    %v860 = vpop.f32.mrb[0].mxu0
    %v861 = vadd.f32 %v557, %v860
    %862 = vmatprep.mubr.bf16.mxu0 %v507
    %863 = vmatmul.mubr.bf16.gmra.mrb[0].mxu0 %v506
    %v864 = vpop.f32.mrb[0].mxu0
    %v865 = vadd.f32 %v553, %v864
    %v866 = vpop.f32.mrb[0].mxu0
    %v867 = vadd.f32 %v557, %v866
    %v868 = vpop.f32.mrb[0].mxu0
    %v869 = vadd.f32 %v553, %v868
    %v870 = vpop.f32.mrb[0].mxu0
    %v871 = vadd.f32 %v557, %v870
    %872 = vmatprep.mubr.bf16.mxu0 %v509
    %873 = vmatmul.mubr.bf16.gmra.mrb[0].mxu0 %v508
    %v874 = vpop.f32.mrb[0].mxu0
    %v875 = vadd.f32 %v553, %v874
    %v876 = vpop.f32.mrb[0].mxu0
    %v877 = vadd.f32 %v557, %v876
    %v878 = vpop.f32.mrb[0].mxu0
    %v879 = vadd.f32 %v553, %v878
    %v880 = vpop.f32.mrb[0].mxu0
    %v881 = vadd.f32 %v557, %v880
    %882 = vmatprep.mubr.bf16.mxu0 %v511
    %883 = vmatmul.mubr.bf16.gmra.mrb[0].mxu0 %v510
    %v884 = vpop.f32.mrb[0].mxu0
    %v885 = vadd.f32 %v553, %v884
    %v886 = vpop.f32.mrb[0].mxu0
    %v887 = vadd.f32 %v557, %v886
    %v888 = vpop.f32.mrb[0].mxu0
    %v889 = vadd.f32 %v553, %v888
    %v890 = vpop.f32.mrb[0].mxu0
    %v891 = vadd.f32 %v557, %v890
    %892 = vmatprep.mubr.bf16.mxu0 %v513
    %893 = vmatmul.mubr.bf16.gmra.mrb[0].mxu0 %v512
    %v894 = vpop.f32.mrb[0].mxu0
    %v895 = vadd.f32 %v553, %v894
    %v896 = vpop.f32.mrb[0].mxu0
    %v897 = vadd.f32 %v557, %v896
    %v898 = vpop.f32.mrb[0].mxu0
    %v899 = vadd.f32 %v553, %v898
    %v900 = vpop.f32.mrb[0].mxu0
    %v901 = vadd.f32 %v557, %v900
    %902 = vmatprep.mubr.bf16.mxu0 %v515
    %903 = vmatmul.mubr.bf16.gmra.mrb[0].mxu0 %v514
    %v904 = vpop.f32.mrb[0].mxu0
    %v905 = vadd.f32 %v553, %v904
    %v906 = vpop.f32.mrb[0].mxu0
    %v907 = vadd.f32 %v557, %v906
    %v908 = vpop.f32.mrb[0].mxu0
    %v909 = vadd.f32 %v553, %v908
    %v910 = vpop.f32.mrb[0].mxu0
    %v911 = vadd.f32 %v557, %v910
    %912 = vdwg.mxu0
    %v913 = vmax.f32 %v755, 0.0
    %v914 = vmax.f32 %v757, 0.0
    %v915 = vmax.f32 %v759, 0.0
    %v916 = vmax.f32 %v761, 0.0
    %v917 = vmax.f32 %v765, 0.0
    %v918 = vmax.f32 %v767, 0.0
    %v919 = vmax.f32 %v769, 0.0
    %v920 = vmax.f32 %v771, 0.0
    %v921 = vmax.f32 %v775, 0.0
    %v922 = vmax.f32 %v777, 0.0
    %v923 = vmax.f32 %v779, 0.0
    %v924 = vmax.f32 %v781, 0.0
    %v925 = vmax.f32 %v785, 0.0
    %v926 = vmax.f32 %v787, 0.0
    %v927 = vmax.f32 %v789, 0.0
    %v928 = vmax.f32 %v791, 0.0
    %v929 = vmax.f32 %v795, 0.0
    %v930 = vmax.f32 %v797, 0.0
    %v931 = vmax.f32 %v799, 0.0
    %v932 = vmax.f32 %v801, 0.0
    %v933 = vmax.f32 %v805, 0.0
    %v934 = vmax.f32 %v807, 0.0
    %v935 = vmax.f32 %v809, 0.0
    %v936 = vmax.f32 %v811, 0.0
    %v937 = vmax.f32 %v815, 0.0
    %v938 = vmax.f32 %v817, 0.0
    %v939 = vmax.f32 %v819, 0.0
    %v940 = vmax.f32 %v821, 0.0
    %v941 = vmax.f32 %v825, 0.0
    %v942 = vmax.f32 %v827, 0.0
    %v943 = vmax.f32 %v829, 0.0
    %v944 = vmax.f32 %v831, 0.0
    %v945 = vmax.f32 %v835, 0.0
    %v946 = vmax.f32 %v837, 0.0
    %v947 = vmax.f32 %v839, 0.0
    %v948 = vmax.f32 %v841, 0.0
    %v949 = vmax.f32 %v845, 0.0
    %v950 = vmax.f32 %v847, 0.0
    %v951 = vmax.f32 %v849, 0.0
    %v952 = vmax.f32 %v851, 0.0
    %v953 = vmax.f32 %v855, 0.0
    %v954 = vmax.f32 %v857, 0.0
    %v955 = vmax.f32 %v859, 0.0
    %v956 = vmax.f32 %v861, 0.0
    %v957 = vmax.f32 %v865, 0.0
    %v958 = vmax.f32 %v867, 0.0
    %v959 = vmax.f32 %v869, 0.0
    %v960 = vmax.f32 %v871, 0.0
    %v961 = vmax.f32 %v875, 0.0
    %v962 = vmax.f32 %v877, 0.0
    %v963 = vmax.f32 %v879, 0.0
    %v964 = vmax.f32 %v881, 0.0
    %v965 = vmax.f32 %v885, 0.0
    %v966 = vmax.f32 %v887, 0.0
    %v967 = vmax.f32 %v889, 0.0
    %v968 = vmax.f32 %v891, 0.0
    %v969 = vmax.f32 %v895, 0.0
    %v970 = vmax.f32 %v897, 0.0
    %v971 = vmax.f32 %v899, 0.0
    %v972 = vmax.f32 %v901, 0.0
    %v973 = vmax.f32 %v905, 0.0
    %v974 = vmax.f32 %v907, 0.0
    %v975 = vmax.f32 %v909, 0.0
    %v976 = vmax.f32 %v911, 0.0
    %v977 = vpack.c.bf16 %v915, %v913
    %v978 = vpack.c.bf16 %v916, %v914
    %v979 = vpack.c.bf16 %v919, %v917
    %v980 = vpack.c.bf16 %v920, %v918
    %v981 = vpack.c.bf16 %v923, %v921
    %v982 = vpack.c.bf16 %v924, %v922
    %v983 = vpack.c.bf16 %v927, %v925
    %v984 = vpack.c.bf16 %v928, %v926
    %v985 = vpack.c.bf16 %v931, %v929
    %v986 = vpack.c.bf16 %v932, %v930
    %v987 = vpack.c.bf16 %v935, %v933
    %v988 = vpack.c.bf16 %v936, %v934
    %v989 = vpack.c.bf16 %v939, %v937
    %v990 = vpack.c.bf16 %v940, %v938
    %v991 = vpack.c.bf16 %v943, %v941
    %v992 = vpack.c.bf16 %v944, %v942
    %v993 = vpack.c.bf16 %v947, %v945
    %v994 = vpack.c.bf16 %v948, %v946
    %v995 = vpack.c.bf16 %v951, %v949
    %v996 = vpack.c.bf16 %v952, %v950
    %v997 = vpack.c.bf16 %v955, %v953
    %v998 = vpack.c.bf16 %v956, %v954
    %v999 = vpack.c.bf16 %v959, %v957
    %v1000 = vpack.c.bf16 %v960, %v958
    %v1001 = vpack.c.bf16 %v963, %v961
    %v1002 = vpack.c.bf16 %v964, %v962
    %v1003 = vpack.c.bf16 %v967, %v965
    %v1004 = vpack.c.bf16 %v968, %v966
    %v1005 = vpack.c.bf16 %v971, %v969
    %v1006 = vpack.c.bf16 %v972, %v970
    %v1007 = vpack.c.bf16 %v975, %v973
    %v1008 = vpack.c.bf16 %v976, %v974
    %v1009 = vld [vmem:[#allocation2] sm:$0xff]
    %v1010 = vld [vmem:[#allocation2 + $0x8] sm:$0xff]
    %v1011 = vld [vmem:[#allocation2 + $0x10] sm:$0xff]
    %v1012 = vld [vmem:[#allocation2 + $0x18] sm:$0xff]
    %v1013 = vld [vmem:[#allocation2 + $0x20] sm:$0xff]
    %v1014 = vld [vmem:[#allocation2 + $0x28] sm:$0xff]
    %v1015 = vld [vmem:[#allocation2 + $0x30] sm:$0xff]
    %v1016 = vld [vmem:[#allocation2 + $0x38] sm:$0xff]
    %v1017 = vld [vmem:[#allocation2 + $0x40] sm:$0xff]
    %v1018 = vld [vmem:[#allocation2 + $0x48] sm:$0xff]
    %v1019 = vld [vmem:[#allocation2 + $0x50] sm:$0xff]
    %v1020 = vld [vmem:[#allocation2 + $0x58] sm:$0xff]
    %v1021 = vld [vmem:[#allocation2 + $0x60] sm:$0xff]
    %v1022 = vld [vmem:[#allocation2 + $0x68] sm:$0xff]
    %v1023 = vld [vmem:[#allocation2 + $0x70] sm:$0xff]
    %v1024 = vld [vmem:[#allocation2 + $0x78] sm:$0xff]
    %v1025 = vld [vmem:[#allocation2 + $0x80] sm:$0xff]
    %v1026 = vld [vmem:[#allocation2 + $0x88] sm:$0xff]
    %v1027 = vld [vmem:[#allocation2 + $0x90] sm:$0xff]
    %v1028 = vld [vmem:[#allocation2 + $0x98] sm:$0xff]
    %v1029 = vld [vmem:[#allocation2 + $0xa0] sm:$0xff]
    %v1030 = vld [vmem:[#allocation2 + $0xa8] sm:$0xff]
    %v1031 = vld [vmem:[#allocation2 + $0xb0] sm:$0xff]
    %v1032 = vld [vmem:[#allocation2 + $0xb8] sm:$0xff]
    %v1033 = vld [vmem:[#allocation2 + $0xc0] sm:$0xff]
    %v1034 = vld [vmem:[#allocation2 + $0xc8] sm:$0xff]
    %v1035 = vld [vmem:[#allocation2 + $0xd0] sm:$0xff]
    %v1036 = vld [vmem:[#allocation2 + $0xd8] sm:$0xff]
    %v1037 = vld [vmem:[#allocation2 + $0xe0] sm:$0xff]
    %v1038 = vld [vmem:[#allocation2 + $0xe8] sm:$0xff]
    %v1039 = vld [vmem:[#allocation2 + $0xf0] sm:$0xff]
    %v1040 = vld [vmem:[#allocation2 + $0xf8] sm:$0xff]
    %v1041 = vld [vmem:[%s6] sm:$0x3]
    %v1043 = vlaneseq
    %v1044 = vshrl.u32 %v1043, 7
    %v1045 = vsub.s32 0, %v1044
    %v1046 = vrot.slane %v1041, %v1045
    %v1047 = vlaneseq
    %v1048 = vshrl.u32 %v1047, 7
    %v1049 = vsub.s32 1, %v1048
    %v1050 = vrot.slane %v1041, %v1049
    %v1085 = vunpack.c.l.b16 %v1009
    %v1086 = vunpack.c.h.b16 %v1009
    %v1087 = vunpack.c.l.b16 %v1010
    %v1088 = vunpack.c.h.b16 %v1010
    %v1089 = vunpack.c.l.b16 %v1011
    %v1090 = vunpack.c.h.b16 %v1011
    %v1091 = vunpack.c.l.b16 %v1012
    %v1092 = vunpack.c.h.b16 %v1012
    %v1093 = vunpack.c.l.b16 %v1013
    %v1094 = vunpack.c.h.b16 %v1013
    %v1095 = vunpack.c.l.b16 %v1014
    %v1096 = vunpack.c.h.b16 %v1014
    %v1097 = vunpack.c.l.b16 %v1015
    %v1098 = vunpack.c.h.b16 %v1015
    %v1099 = vunpack.c.l.b16 %v1016
    %v1100 = vunpack.c.h.b16 %v1016
    %v1101 = vunpack.c.l.b16 %v1017
    %v1102 = vunpack.c.h.b16 %v1017
    %v1103 = vunpack.c.l.b16 %v1018
    %v1104 = vunpack.c.h.b16 %v1018
    %v1105 = vunpack.c.l.b16 %v1019
    %v1106 = vunpack.c.h.b16 %v1019
    %v1107 = vunpack.c.l.b16 %v1020
    %v1108 = vunpack.c.h.b16 %v1020
    %v1109 = vunpack.c.l.b16 %v1021
    %v1110 = vunpack.c.h.b16 %v1021
    %v1111 = vunpack.c.l.b16 %v1022
    %v1112 = vunpack.c.h.b16 %v1022
    %v1113 = vunpack.c.l.b16 %v1023
    %v1114 = vunpack.c.h.b16 %v1023
    %v1115 = vunpack.c.l.b16 %v1024
    %v1116 = vunpack.c.h.b16 %v1024
    %v1117 = vunpack.c.l.b16 %v1025
    %v1118 = vunpack.c.h.b16 %v1025
    %v1119 = vunpack.c.l.b16 %v1026
    %v1120 = vunpack.c.h.b16 %v1026
    %v1121 = vunpack.c.l.b16 %v1027
    %v1122 = vunpack.c.h.b16 %v1027
    %v1123 = vunpack.c.l.b16 %v1028
    %v1124 = vunpack.c.h.b16 %v1028
    %v1125 = vunpack.c.l.b16 %v1029
    %v1126 = vunpack.c.h.b16 %v1029
    %v1127 = vunpack.c.l.b16 %v1030
    %v1128 = vunpack.c.h.b16 %v1030
    %v1129 = vunpack.c.l.b16 %v1031
    %v1130 = vunpack.c.h.b16 %v1031
    %v1131 = vunpack.c.l.b16 %v1032
    %v1132 = vunpack.c.h.b16 %v1032
    %v1133 = vunpack.c.l.b16 %v1033
    %v1134 = vunpack.c.h.b16 %v1033
    %v1135 = vunpack.c.l.b16 %v1034
    %v1136 = vunpack.c.h.b16 %v1034
    %v1137 = vunpack.c.l.b16 %v1035
    %v1138 = vunpack.c.h.b16 %v1035
    %v1139 = vunpack.c.l.b16 %v1036
    %v1140 = vunpack.c.h.b16 %v1036
    %v1141 = vunpack.c.l.b16 %v1037
    %v1142 = vunpack.c.h.b16 %v1037
    %v1143 = vunpack.c.l.b16 %v1038
    %v1144 = vunpack.c.h.b16 %v1038
    %v1145 = vunpack.c.l.b16 %v1039
    %v1146 = vunpack.c.h.b16 %v1039
    %v1147 = vunpack.c.l.b16 %v1040
    %v1148 = vunpack.c.h.b16 %v1040
    %v1149 = vpack.c.b16 %v1087, %v1085
    %v1150 = vpack.c.b16 %v1088, %v1086
    %v1151 = vpack.c.b16 %v1091, %v1089
    %v1152 = vpack.c.b16 %v1092, %v1090
    %v1153 = vpack.c.b16 %v1095, %v1093
    %v1154 = vpack.c.b16 %v1096, %v1094
    %v1155 = vpack.c.b16 %v1099, %v1097
    %v1156 = vpack.c.b16 %v1100, %v1098
    %v1157 = vpack.c.b16 %v1103, %v1101
    %v1158 = vpack.c.b16 %v1104, %v1102
    %v1159 = vpack.c.b16 %v1107, %v1105
    %v1160 = vpack.c.b16 %v1108, %v1106
    %v1161 = vpack.c.b16 %v1111, %v1109
    %v1162 = vpack.c.b16 %v1112, %v1110
    %v1163 = vpack.c.b16 %v1115, %v1113
    %v1164 = vpack.c.b16 %v1116, %v1114
    %v1165 = vpack.c.b16 %v1119, %v1117
    %v1166 = vpack.c.b16 %v1120, %v1118
    %v1167 = vpack.c.b16 %v1123, %v1121
    %v1168 = vpack.c.b16 %v1124, %v1122
    %v1169 = vpack.c.b16 %v1127, %v1125
    %v1170 = vpack.c.b16 %v1128, %v1126
    %v1171 = vpack.c.b16 %v1131, %v1129
    %v1172 = vpack.c.b16 %v1132, %v1130
    %v1173 = vpack.c.b16 %v1135, %v1133
    %v1174 = vpack.c.b16 %v1136, %v1134
    %v1175 = vpack.c.b16 %v1139, %v1137
    %v1176 = vpack.c.b16 %v1140, %v1138
    %v1177 = vpack.c.b16 %v1143, %v1141
    %v1178 = vpack.c.b16 %v1144, %v1142
    %v1179 = vpack.c.b16 %v1147, %v1145
    %v1180 = vpack.c.b16 %v1148, %v1146
    %1213 = vmatprep.subr.bf16.mxu0 %v1150
    %1214 = vmatpush1.bf16.msra.mxu0 %v1149
    %1215 = vmatprep.subr.bf16.mxu0 %v1152
    %1216 = vmatpush1.bf16.msra.mxu0 %v1151
    %1217 = vmatprep.subr.bf16.mxu0 %v1154
    %1218 = vmatpush1.bf16.msra.mxu0 %v1153
    %1219 = vmatprep.subr.bf16.mxu0 %v1156
    %1220 = vmatpush1.bf16.msra.mxu0 %v1155
    %1221 = vmatprep.subr.bf16.mxu0 %v1158
    %1222 = vmatpush1.bf16.msra.mxu0 %v1157
    %1223 = vmatprep.subr.bf16.mxu0 %v1160
    %1224 = vmatpush1.bf16.msra.mxu0 %v1159
    %1225 = vmatprep.subr.bf16.mxu0 %v1162
    %1226 = vmatpush1.bf16.msra.mxu0 %v1161
    %1227 = vmatprep.subr.bf16.mxu0 %v1164
    %1228 = vmatpush1.bf16.msra.mxu0 %v1163
    %1229 = vmatprep.subr.bf16.mxu0 %v1166
    %1230 = vmatpush1.bf16.msra.mxu0 %v1165
    %1231 = vmatprep.subr.bf16.mxu0 %v1168
    %1232 = vmatpush1.bf16.msra.mxu0 %v1167
    %1233 = vmatprep.subr.bf16.mxu0 %v1170
    %1234 = vmatpush1.bf16.msra.mxu0 %v1169
    %1235 = vmatprep.subr.bf16.mxu0 %v1172
    %1236 = vmatpush1.bf16.msra.mxu0 %v1171
    %1237 = vmatprep.subr.bf16.mxu0 %v1174
    %1238 = vmatpush1.bf16.msra.mxu0 %v1173
    %1239 = vmatprep.subr.bf16.mxu0 %v1176
    %1240 = vmatpush1.bf16.msra.mxu0 %v1175
    %1241 = vmatprep.subr.bf16.mxu0 %v1178
    %1242 = vmatpush1.bf16.msra.mxu0 %v1177
    %1243 = vmatprep.subr.bf16.mxu0 %v1180
    %1244 = vmatpush1.bf16.msra.mxu0 %v1179
    %1245 = vmatprep.mubr.bf16.mxu0 %v978
    %1246 = vmatmul.mubr.bf16.gmra.mrb[0].mxu0 %v977
    %v1247 = vpop.f32.mrb[0].mxu0
    %v1248 = vadd.f32 %v1046, %v1247
    %v1249 = vpop.f32.mrb[0].mxu0
    %v1250 = vadd.f32 %v1050, %v1249
    %v1251 = vpop.f32.mrb[0].mxu0
    %v1252 = vadd.f32 %v1046, %v1251
    %v1253 = vpop.f32.mrb[0].mxu0
    %v1254 = vadd.f32 %v1050, %v1253
    %1255 = vmatprep.mubr.bf16.mxu0 %v980
    %1256 = vmatmul.mubr.bf16.gmra.mrb[0].mxu0 %v979
    %v1257 = vpop.f32.mrb[0].mxu0
    %v1258 = vadd.f32 %v1046, %v1257
    %v1259 = vpop.f32.mrb[0].mxu0
    %v1260 = vadd.f32 %v1050, %v1259
    %v1261 = vpop.f32.mrb[0].mxu0
    %v1262 = vadd.f32 %v1046, %v1261
    %v1263 = vpop.f32.mrb[0].mxu0
    %v1264 = vadd.f32 %v1050, %v1263
    %1265 = vmatprep.mubr.bf16.mxu0 %v982
    %1266 = vmatmul.mubr.bf16.gmra.mrb[0].mxu0 %v981
    %v1267 = vpop.f32.mrb[0].mxu0
    %v1268 = vadd.f32 %v1046, %v1267
    %v1269 = vpop.f32.mrb[0].mxu0
    %v1270 = vadd.f32 %v1050, %v1269
    %v1271 = vpop.f32.mrb[0].mxu0
    %v1272 = vadd.f32 %v1046, %v1271
    %v1273 = vpop.f32.mrb[0].mxu0
    %v1274 = vadd.f32 %v1050, %v1273
    %1275 = vmatprep.mubr.bf16.mxu0 %v984
    %1276 = vmatmul.mubr.bf16.gmra.mrb[0].mxu0 %v983
    %v1277 = vpop.f32.mrb[0].mxu0
    %v1278 = vadd.f32 %v1046, %v1277
    %v1279 = vpop.f32.mrb[0].mxu0
    %v1280 = vadd.f32 %v1050, %v1279
    %v1281 = vpop.f32.mrb[0].mxu0
    %v1282 = vadd.f32 %v1046, %v1281
    %v1283 = vpop.f32.mrb[0].mxu0
    %v1284 = vadd.f32 %v1050, %v1283
    %1285 = vmatprep.mubr.bf16.mxu0 %v986
    %1286 = vmatmul.mubr.bf16.gmra.mrb[0].mxu0 %v985
    %v1287 = vpop.f32.mrb[0].mxu0
    %v1288 = vadd.f32 %v1046, %v1287
    %v1289 = vpop.f32.mrb[0].mxu0
    %v1290 = vadd.f32 %v1050, %v1289
    %v1291 = vpop.f32.mrb[0].mxu0
    %v1292 = vadd.f32 %v1046, %v1291
    %v1293 = vpop.f32.mrb[0].mxu0
    %v1294 = vadd.f32 %v1050, %v1293
    %1295 = vmatprep.mubr.bf16.mxu0 %v988
    %1296 = vmatmul.mubr.bf16.gmra.mrb[0].mxu0 %v987
    %v1297 = vpop.f32.mrb[0].mxu0
    %v1298 = vadd.f32 %v1046, %v1297
    %v1299 = vpop.f32.mrb[0].mxu0
    %v1300 = vadd.f32 %v1050, %v1299
    %v1301 = vpop.f32.mrb[0].mxu0
    %v1302 = vadd.f32 %v1046, %v1301
    %v1303 = vpop.f32.mrb[0].mxu0
    %v1304 = vadd.f32 %v1050, %v1303
    %1305 = vmatprep.mubr.bf16.mxu0 %v990
    %1306 = vmatmul.mubr.bf16.gmra.mrb[0].mxu0 %v989
    %v1307 = vpop.f32.mrb[0].mxu0
    %v1308 = vadd.f32 %v1046, %v1307
    %v1309 = vpop.f32.mrb[0].mxu0
    %v1310 = vadd.f32 %v1050, %v1309
    %v1311 = vpop.f32.mrb[0].mxu0
    %v1312 = vadd.f32 %v1046, %v1311
    %v1313 = vpop.f32.mrb[0].mxu0
    %v1314 = vadd.f32 %v1050, %v1313
    %1315 = vmatprep.mubr.bf16.mxu0 %v992
    %1316 = vmatmul.mubr.bf16.gmra.mrb[0].mxu0 %v991
    %v1317 = vpop.f32.mrb[0].mxu0
    %v1318 = vadd.f32 %v1046, %v1317
    %v1319 = vpop.f32.mrb[0].mxu0
    %v1320 = vadd.f32 %v1050, %v1319
    %v1321 = vpop.f32.mrb[0].mxu0
    %v1322 = vadd.f32 %v1046, %v1321
    %v1323 = vpop.f32.mrb[0].mxu0
    %v1324 = vadd.f32 %v1050, %v1323
    %1325 = vmatprep.mubr.bf16.mxu0 %v994
    %1326 = vmatmul.mubr.bf16.gmra.mrb[0].mxu0 %v993
    %v1327 = vpop.f32.mrb[0].mxu0
    %v1328 = vadd.f32 %v1046, %v1327
    %v1329 = vpop.f32.mrb[0].mxu0
    %v1330 = vadd.f32 %v1050, %v1329
    %v1331 = vpop.f32.mrb[0].mxu0
    %v1332 = vadd.f32 %v1046, %v1331
    %v1333 = vpop.f32.mrb[0].mxu0
    %v1334 = vadd.f32 %v1050, %v1333
    %1335 = vmatprep.mubr.bf16.mxu0 %v996
    %1336 = vmatmul.mubr.bf16.gmra.mrb[0].mxu0 %v995
    %v1337 = vpop.f32.mrb[0].mxu0
    %v1338 = vadd.f32 %v1046, %v1337
    %v1339 = vpop.f32.mrb[0].mxu0
    %v1340 = vadd.f32 %v1050, %v1339
    %v1341 = vpop.f32.mrb[0].mxu0
    %v1342 = vadd.f32 %v1046, %v1341
    %v1343 = vpop.f32.mrb[0].mxu0
    %v1344 = vadd.f32 %v1050, %v1343
    %1345 = vmatprep.mubr.bf16.mxu0 %v998
    %1346 = vmatmul.mubr.bf16.gmra.mrb[0].mxu0 %v997
    %v1347 = vpop.f32.mrb[0].mxu0
    %v1348 = vadd.f32 %v1046, %v1347
    %v1349 = vpop.f32.mrb[0].mxu0
    %v1350 = vadd.f32 %v1050, %v1349
    %v1351 = vpop.f32.mrb[0].mxu0
    %v1352 = vadd.f32 %v1046, %v1351
    %v1353 = vpop.f32.mrb[0].mxu0
    %v1354 = vadd.f32 %v1050, %v1353
    %1355 = vmatprep.mubr.bf16.mxu0 %v1000
    %1356 = vmatmul.mubr.bf16.gmra.mrb[0].mxu0 %v999
    %v1357 = vpop.f32.mrb[0].mxu0
    %v1358 = vadd.f32 %v1046, %v1357
    %v1359 = vpop.f32.mrb[0].mxu0
    %v1360 = vadd.f32 %v1050, %v1359
    %v1361 = vpop.f32.mrb[0].mxu0
    %v1362 = vadd.f32 %v1046, %v1361
    %v1363 = vpop.f32.mrb[0].mxu0
    %v1364 = vadd.f32 %v1050, %v1363
    %1365 = vmatprep.mubr.bf16.mxu0 %v1002
    %1366 = vmatmul.mubr.bf16.gmra.mrb[0].mxu0 %v1001
    %v1367 = vpop.f32.mrb[0].mxu0
    %v1368 = vadd.f32 %v1046, %v1367
    %v1369 = vpop.f32.mrb[0].mxu0
    %v1370 = vadd.f32 %v1050, %v1369
    %v1371 = vpop.f32.mrb[0].mxu0
    %v1372 = vadd.f32 %v1046, %v1371
    %v1373 = vpop.f32.mrb[0].mxu0
    %v1374 = vadd.f32 %v1050, %v1373
    %1375 = vmatprep.mubr.bf16.mxu0 %v1004
    %1376 = vmatmul.mubr.bf16.gmra.mrb[0].mxu0 %v1003
    %v1377 = vpop.f32.mrb[0].mxu0
    %v1378 = vadd.f32 %v1046, %v1377
    %v1379 = vpop.f32.mrb[0].mxu0
    %v1380 = vadd.f32 %v1050, %v1379
    %v1381 = vpop.f32.mrb[0].mxu0
    %v1382 = vadd.f32 %v1046, %v1381
    %v1383 = vpop.f32.mrb[0].mxu0
    %v1384 = vadd.f32 %v1050, %v1383
    %1385 = vmatprep.mubr.bf16.mxu0 %v1006
    %1386 = vmatmul.mubr.bf16.gmra.mrb[0].mxu0 %v1005
    %v1387 = vpop.f32.mrb[0].mxu0
    %v1388 = vadd.f32 %v1046, %v1387
    %v1389 = vpop.f32.mrb[0].mxu0
    %v1390 = vadd.f32 %v1050, %v1389
    %v1391 = vpop.f32.mrb[0].mxu0
    %v1392 = vadd.f32 %v1046, %v1391
    %v1393 = vpop.f32.mrb[0].mxu0
    %v1394 = vadd.f32 %v1050, %v1393
    %1395 = vmatprep.mubr.bf16.mxu0 %v1008
    %1396 = vmatmul.mubr.bf16.gmra.mrb[0].mxu0 %v1007
    %v1397 = vpop.f32.mrb[0].mxu0
    %v1398 = vadd.f32 %v1046, %v1397
    %v1399 = vpop.f32.mrb[0].mxu0
    %v1400 = vadd.f32 %v1050, %v1399
    %v1401 = vpop.f32.mrb[0].mxu0
    %v1402 = vadd.f32 %v1046, %v1401
    %v1403 = vpop.f32.mrb[0].mxu0
    %v1404 = vadd.f32 %v1050, %v1403
    %1405 = vdwg.mxu0
    %v1406 = vmax.f32 %v1248, 0.0
    %v1407 = vmax.f32 %v1250, 0.0
    %v1408 = vmax.f32 %v1252, 0.0
    %v1409 = vmax.f32 %v1254, 0.0
    %v1410 = vmax.f32 %v1258, 0.0
    %v1411 = vmax.f32 %v1260, 0.0
    %v1412 = vmax.f32 %v1262, 0.0
    %v1413 = vmax.f32 %v1264, 0.0
    %v1414 = vmax.f32 %v1268, 0.0
    %v1415 = vmax.f32 %v1270, 0.0
    %v1416 = vmax.f32 %v1272, 0.0
    %v1417 = vmax.f32 %v1274, 0.0
    %v1418 = vmax.f32 %v1278, 0.0
    %v1419 = vmax.f32 %v1280, 0.0
    %v1420 = vmax.f32 %v1282, 0.0
    %v1421 = vmax.f32 %v1284, 0.0
    %v1422 = vmax.f32 %v1288, 0.0
    %v1423 = vmax.f32 %v1290, 0.0
    %v1424 = vmax.f32 %v1292, 0.0
    %v1425 = vmax.f32 %v1294, 0.0
    %v1426 = vmax.f32 %v1298, 0.0
    %v1427 = vmax.f32 %v1300, 0.0
    %v1428 = vmax.f32 %v1302, 0.0
    %v1429 = vmax.f32 %v1304, 0.0
    %v1430 = vmax.f32 %v1308, 0.0
    %v1431 = vmax.f32 %v1310, 0.0
    %v1432 = vmax.f32 %v1312, 0.0
    %v1433 = vmax.f32 %v1314, 0.0
    %v1434 = vmax.f32 %v1318, 0.0
    %v1435 = vmax.f32 %v1320, 0.0
    %v1436 = vmax.f32 %v1322, 0.0
    %v1437 = vmax.f32 %v1324, 0.0
    %v1438 = vmax.f32 %v1328, 0.0
    %v1439 = vmax.f32 %v1330, 0.0
    %v1440 = vmax.f32 %v1332, 0.0
    %v1441 = vmax.f32 %v1334, 0.0
    %v1442 = vmax.f32 %v1338, 0.0
    %v1443 = vmax.f32 %v1340, 0.0
    %v1444 = vmax.f32 %v1342, 0.0
    %v1445 = vmax.f32 %v1344, 0.0
    %v1446 = vmax.f32 %v1348, 0.0
    %v1447 = vmax.f32 %v1350, 0.0
    %v1448 = vmax.f32 %v1352, 0.0
    %v1449 = vmax.f32 %v1354, 0.0
    %v1450 = vmax.f32 %v1358, 0.0
    %v1451 = vmax.f32 %v1360, 0.0
    %v1452 = vmax.f32 %v1362, 0.0
    %v1453 = vmax.f32 %v1364, 0.0
    %v1454 = vmax.f32 %v1368, 0.0
    %v1455 = vmax.f32 %v1370, 0.0
    %v1456 = vmax.f32 %v1372, 0.0
    %v1457 = vmax.f32 %v1374, 0.0
    %v1458 = vmax.f32 %v1378, 0.0
    %v1459 = vmax.f32 %v1380, 0.0
    %v1460 = vmax.f32 %v1382, 0.0
    %v1461 = vmax.f32 %v1384, 0.0
    %v1462 = vmax.f32 %v1388, 0.0
    %v1463 = vmax.f32 %v1390, 0.0
    %v1464 = vmax.f32 %v1392, 0.0
    %v1465 = vmax.f32 %v1394, 0.0
    %v1466 = vmax.f32 %v1398, 0.0
    %v1467 = vmax.f32 %v1400, 0.0
    %v1468 = vmax.f32 %v1402, 0.0
    %v1469 = vmax.f32 %v1404, 0.0
    %v1470 = vpack.c.bf16 %v1408, %v1406
    %v1471 = vpack.c.bf16 %v1409, %v1407
    %v1472 = vpack.c.bf16 %v1412, %v1410
    %v1473 = vpack.c.bf16 %v1413, %v1411
    %v1474 = vpack.c.bf16 %v1416, %v1414
    %v1475 = vpack.c.bf16 %v1417, %v1415
    %v1476 = vpack.c.bf16 %v1420, %v1418
    %v1477 = vpack.c.bf16 %v1421, %v1419
    %v1478 = vpack.c.bf16 %v1424, %v1422
    %v1479 = vpack.c.bf16 %v1425, %v1423
    %v1480 = vpack.c.bf16 %v1428, %v1426
    %v1481 = vpack.c.bf16 %v1429, %v1427
    %v1482 = vpack.c.bf16 %v1432, %v1430
    %v1483 = vpack.c.bf16 %v1433, %v1431
    %v1484 = vpack.c.bf16 %v1436, %v1434
    %v1485 = vpack.c.bf16 %v1437, %v1435
    %v1486 = vpack.c.bf16 %v1440, %v1438
    %v1487 = vpack.c.bf16 %v1441, %v1439
    %v1488 = vpack.c.bf16 %v1444, %v1442
    %v1489 = vpack.c.bf16 %v1445, %v1443
    %v1490 = vpack.c.bf16 %v1448, %v1446
    %v1491 = vpack.c.bf16 %v1449, %v1447
    %v1492 = vpack.c.bf16 %v1452, %v1450
    %v1493 = vpack.c.bf16 %v1453, %v1451
    %v1494 = vpack.c.bf16 %v1456, %v1454
    %v1495 = vpack.c.bf16 %v1457, %v1455
    %v1496 = vpack.c.bf16 %v1460, %v1458
    %v1497 = vpack.c.bf16 %v1461, %v1459
    %v1498 = vpack.c.bf16 %v1464, %v1462
    %v1499 = vpack.c.bf16 %v1465, %v1463
    %v1500 = vpack.c.bf16 %v1468, %v1466
    %v1501 = vpack.c.bf16 %v1469, %v1467
    %v1502 = vld [vmem:[#allocation5] sm:$0xff]
    %v1503 = vld [vmem:[#allocation5 + $0x8] sm:$0xff]
    %v1504 = vld [vmem:[#allocation5 + $0x10] sm:$0xff]
    %v1505 = vld [vmem:[#allocation5 + $0x18] sm:$0xff]
    %v1506 = vld [vmem:[#allocation5 + $0x20] sm:$0xff]
    %v1507 = vld [vmem:[#allocation5 + $0x28] sm:$0xff]
    %v1508 = vld [vmem:[#allocation5 + $0x30] sm:$0xff]
    %v1509 = vld [vmem:[#allocation5 + $0x38] sm:$0xff]
    %v1510 = vld [vmem:[#allocation5 + $0x40] sm:$0xff]
    %v1511 = vld [vmem:[#allocation5 + $0x48] sm:$0xff]
    %v1512 = vld [vmem:[#allocation5 + $0x50] sm:$0xff]
    %v1513 = vld [vmem:[#allocation5 + $0x58] sm:$0xff]
    %v1514 = vld [vmem:[#allocation5 + $0x60] sm:$0xff]
    %v1515 = vld [vmem:[#allocation5 + $0x68] sm:$0xff]
    %v1516 = vld [vmem:[#allocation5 + $0x70] sm:$0xff]
    %v1517 = vld [vmem:[#allocation5 + $0x78] sm:$0xff]
    %v1518 = vld [vmem:[#allocation5 + $0x80] sm:$0xff]
    %v1519 = vld [vmem:[#allocation5 + $0x88] sm:$0xff]
    %v1520 = vld [vmem:[#allocation5 + $0x90] sm:$0xff]
    %v1521 = vld [vmem:[#allocation5 + $0x98] sm:$0xff]
    %v1522 = vld [vmem:[#allocation5 + $0xa0] sm:$0xff]
    %v1523 = vld [vmem:[#allocation5 + $0xa8] sm:$0xff]
    %v1524 = vld [vmem:[#allocation5 + $0xb0] sm:$0xff]
    %v1525 = vld [vmem:[#allocation5 + $0xb8] sm:$0xff]
    %v1526 = vld [vmem:[#allocation5 + $0xc0] sm:$0xff]
    %v1527 = vld [vmem:[#allocation5 + $0xc8] sm:$0xff]
    %v1528 = vld [vmem:[#allocation5 + $0xd0] sm:$0xff]
    %v1529 = vld [vmem:[#allocation5 + $0xd8] sm:$0xff]
    %v1530 = vld [vmem:[#allocation5 + $0xe0] sm:$0xff]
    %v1531 = vld [vmem:[#allocation5 + $0xe8] sm:$0xff]
    %v1532 = vld [vmem:[#allocation5 + $0xf0] sm:$0xff]
    %v1533 = vld [vmem:[#allocation5 + $0xf8] sm:$0xff]
    %v1534 = vld [vmem:[%s8] sm:$0x3]
    %v1536 = vlaneseq
    %v1537 = vshrl.u32 %v1536, 7
    %v1538 = vsub.s32 0, %v1537
    %v1539 = vrot.slane %v1534, %v1538
    %v1540 = vlaneseq
    %v1541 = vshrl.u32 %v1540, 7
    %v1542 = vsub.s32 1, %v1541
    %v1543 = vrot.slane %v1534, %v1542
    %v1578 = vunpack.c.l.b16 %v1502
    %v1579 = vunpack.c.h.b16 %v1502
    %v1580 = vunpack.c.l.b16 %v1503
    %v1581 = vunpack.c.h.b16 %v1503
    %v1582 = vunpack.c.l.b16 %v1504
    %v1583 = vunpack.c.h.b16 %v1504
    %v1584 = vunpack.c.l.b16 %v1505
    %v1585 = vunpack.c.h.b16 %v1505
    %v1586 = vunpack.c.l.b16 %v1506
    %v1587 = vunpack.c.h.b16 %v1506
    %v1588 = vunpack.c.l.b16 %v1507
    %v1589 = vunpack.c.h.b16 %v1507
    %v1590 = vunpack.c.l.b16 %v1508
    %v1591 = vunpack.c.h.b16 %v1508
    %v1592 = vunpack.c.l.b16 %v1509
    %v1593 = vunpack.c.h.b16 %v1509
    %v1594 = vunpack.c.l.b16 %v1510
    %v1595 = vunpack.c.h.b16 %v1510
    %v1596 = vunpack.c.l.b16 %v1511
    %v1597 = vunpack.c.h.b16 %v1511
    %v1598 = vunpack.c.l.b16 %v1512
    %v1599 = vunpack.c.h.b16 %v1512
    %v1600 = vunpack.c.l.b16 %v1513
    %v1601 = vunpack.c.h.b16 %v1513
    %v1602 = vunpack.c.l.b16 %v1514
    %v1603 = vunpack.c.h.b16 %v1514
    %v1604 = vunpack.c.l.b16 %v1515
    %v1605 = vunpack.c.h.b16 %v1515
    %v1606 = vunpack.c.l.b16 %v1516
    %v1607 = vunpack.c.h.b16 %v1516
    %v1608 = vunpack.c.l.b16 %v1517
    %v1609 = vunpack.c.h.b16 %v1517
    %v1610 = vunpack.c.l.b16 %v1518
    %v1611 = vunpack.c.h.b16 %v1518
    %v1612 = vunpack.c.l.b16 %v1519
    %v1613 = vunpack.c.h.b16 %v1519
    %v1614 = vunpack.c.l.b16 %v1520
    %v1615 = vunpack.c.h.b16 %v1520
    %v1616 = vunpack.c.l.b16 %v1521
    %v1617 = vunpack.c.h.b16 %v1521
    %v1618 = vunpack.c.l.b16 %v1522
    %v1619 = vunpack.c.h.b16 %v1522
    %v1620 = vunpack.c.l.b16 %v1523
    %v1621 = vunpack.c.h.b16 %v1523
    %v1622 = vunpack.c.l.b16 %v1524
    %v1623 = vunpack.c.h.b16 %v1524
    %v1624 = vunpack.c.l.b16 %v1525
    %v1625 = vunpack.c.h.b16 %v1525
    %v1626 = vunpack.c.l.b16 %v1526
    %v1627 = vunpack.c.h.b16 %v1526
    %v1628 = vunpack.c.l.b16 %v1527
    %v1629 = vunpack.c.h.b16 %v1527
    %v1630 = vunpack.c.l.b16 %v1528
    %v1631 = vunpack.c.h.b16 %v1528
    %v1632 = vunpack.c.l.b16 %v1529
    %v1633 = vunpack.c.h.b16 %v1529
    %v1634 = vunpack.c.l.b16 %v1530
    %v1635 = vunpack.c.h.b16 %v1530
    %v1636 = vunpack.c.l.b16 %v1531
    %v1637 = vunpack.c.h.b16 %v1531
    %v1638 = vunpack.c.l.b16 %v1532
    %v1639 = vunpack.c.h.b16 %v1532
    %v1640 = vunpack.c.l.b16 %v1533
    %v1641 = vunpack.c.h.b16 %v1533
    %v1642 = vpack.c.b16 %v1580, %v1578
    %v1643 = vpack.c.b16 %v1581, %v1579
    %v1644 = vpack.c.b16 %v1584, %v1582
    %v1645 = vpack.c.b16 %v1585, %v1583
    %v1646 = vpack.c.b16 %v1588, %v1586
    %v1647 = vpack.c.b16 %v1589, %v1587
    %v1648 = vpack.c.b16 %v1592, %v1590
    %v1649 = vpack.c.b16 %v1593, %v1591
    %v1650 = vpack.c.b16 %v1596, %v1594
    %v1651 = vpack.c.b16 %v1597, %v1595
    %v1652 = vpack.c.b16 %v1600, %v1598
    %v1653 = vpack.c.b16 %v1601, %v1599
    %v1654 = vpack.c.b16 %v1604, %v1602
    %v1655 = vpack.c.b16 %v1605, %v1603
    %v1656 = vpack.c.b16 %v1608, %v1606
    %v1657 = vpack.c.b16 %v1609, %v1607
    %v1658 = vpack.c.b16 %v1612, %v1610
    %v1659 = vpack.c.b16 %v1613, %v1611
    %v1660 = vpack.c.b16 %v1616, %v1614
    %v1661 = vpack.c.b16 %v1617, %v1615
    %v1662 = vpack.c.b16 %v1620, %v1618
    %v1663 = vpack.c.b16 %v1621, %v1619
    %v1664 = vpack.c.b16 %v1624, %v1622
    %v1665 = vpack.c.b16 %v1625, %v1623
    %v1666 = vpack.c.b16 %v1628, %v1626
    %v1667 = vpack.c.b16 %v1629, %v1627
    %v1668 = vpack.c.b16 %v1632, %v1630
    %v1669 = vpack.c.b16 %v1633, %v1631
    %v1670 = vpack.c.b16 %v1636, %v1634
    %v1671 = vpack.c.b16 %v1637, %v1635
    %v1672 = vpack.c.b16 %v1640, %v1638
    %v1673 = vpack.c.b16 %v1641, %v1639
    %1706 = vmatprep.subr.bf16.mxu0 %v1643
    %1707 = vmatpush1.bf16.msra.mxu0 %v1642
    %1708 = vmatprep.subr.bf16.mxu0 %v1645
    %1709 = vmatpush1.bf16.msra.mxu0 %v1644
    %1710 = vmatprep.subr.bf16.mxu0 %v1647
    %1711 = vmatpush1.bf16.msra.mxu0 %v1646
    %1712 = vmatprep.subr.bf16.mxu0 %v1649
    %1713 = vmatpush1.bf16.msra.mxu0 %v1648
    %1714 = vmatprep.subr.bf16.mxu0 %v1651
    %1715 = vmatpush1.bf16.msra.mxu0 %v1650
    %1716 = vmatprep.subr.bf16.mxu0 %v1653
    %1717 = vmatpush1.bf16.msra.mxu0 %v1652
    %1718 = vmatprep.subr.bf16.mxu0 %v1655
    %1719 = vmatpush1.bf16.msra.mxu0 %v1654
    %1720 = vmatprep.subr.bf16.mxu0 %v1657
    %1721 = vmatpush1.bf16.msra.mxu0 %v1656
    %1722 = vmatprep.subr.bf16.mxu0 %v1659
    %1723 = vmatpush1.bf16.msra.mxu0 %v1658
    %1724 = vmatprep.subr.bf16.mxu0 %v1661
    %1725 = vmatpush1.bf16.msra.mxu0 %v1660
    %1726 = vmatprep.subr.bf16.mxu0 %v1663
    %1727 = vmatpush1.bf16.msra.mxu0 %v1662
    %1728 = vmatprep.subr.bf16.mxu0 %v1665
    %1729 = vmatpush1.bf16.msra.mxu0 %v1664
    %1730 = vmatprep.subr.bf16.mxu0 %v1667
    %1731 = vmatpush1.bf16.msra.mxu0 %v1666
    %1732 = vmatprep.subr.bf16.mxu0 %v1669
    %1733 = vmatpush1.bf16.msra.mxu0 %v1668
    %1734 = vmatprep.subr.bf16.mxu0 %v1671
    %1735 = vmatpush1.bf16.msra.mxu0 %v1670
    %1736 = vmatprep.subr.bf16.mxu0 %v1673
    %1737 = vmatpush1.bf16.msra.mxu0 %v1672
    %1738 = vmatprep.mubr.bf16.mxu0 %v1471
    %1739 = vmatmul.mubr.bf16.gmra.mrb[0].mxu0 %v1470
    %v1740 = vpop.f32.mrb[0].mxu0
    %v1741 = vadd.f32 %v1539, %v1740
    %v1742 = vpop.f32.mrb[0].mxu0
    %v1743 = vadd.f32 %v1543, %v1742
    %v1744 = vpop.f32.mrb[0].mxu0
    %v1745 = vadd.f32 %v1539, %v1744
    %v1746 = vpop.f32.mrb[0].mxu0
    %v1747 = vadd.f32 %v1543, %v1746
    %1748 = vmatprep.mubr.bf16.mxu0 %v1473
    %1749 = vmatmul.mubr.bf16.gmra.mrb[0].mxu0 %v1472
    %v1750 = vpop.f32.mrb[0].mxu0
    %v1751 = vadd.f32 %v1539, %v1750
    %v1752 = vpop.f32.mrb[0].mxu0
    %v1753 = vadd.f32 %v1543, %v1752
    %v1754 = vpop.f32.mrb[0].mxu0
    %v1755 = vadd.f32 %v1539, %v1754
    %v1756 = vpop.f32.mrb[0].mxu0
    %v1757 = vadd.f32 %v1543, %v1756
    %1758 = vmatprep.mubr.bf16.mxu0 %v1475
    %1759 = vmatmul.mubr.bf16.gmra.mrb[0].mxu0 %v1474
    %v1760 = vpop.f32.mrb[0].mxu0
    %v1761 = vadd.f32 %v1539, %v1760
    %v1762 = vpop.f32.mrb[0].mxu0
    %v1763 = vadd.f32 %v1543, %v1762
    %v1764 = vpop.f32.mrb[0].mxu0
    %v1765 = vadd.f32 %v1539, %v1764
    %v1766 = vpop.f32.mrb[0].mxu0
    %v1767 = vadd.f32 %v1543, %v1766
    %1768 = vmatprep.mubr.bf16.mxu0 %v1477
    %1769 = vmatmul.mubr.bf16.gmra.mrb[0].mxu0 %v1476
    %v1770 = vpop.f32.mrb[0].mxu0
    %v1771 = vadd.f32 %v1539, %v1770
    %v1772 = vpop.f32.mrb[0].mxu0
    %v1773 = vadd.f32 %v1543, %v1772
    %v1774 = vpop.f32.mrb[0].mxu0
    %v1775 = vadd.f32 %v1539, %v1774
    %v1776 = vpop.f32.mrb[0].mxu0
    %v1777 = vadd.f32 %v1543, %v1776
    %1778 = vmatprep.mubr.bf16.mxu0 %v1479
    %1779 = vmatmul.mubr.bf16.gmra.mrb[0].mxu0 %v1478
    %v1780 = vpop.f32.mrb[0].mxu0
    %v1781 = vadd.f32 %v1539, %v1780
    %v1782 = vpop.f32.mrb[0].mxu0
    %v1783 = vadd.f32 %v1543, %v1782
    %v1784 = vpop.f32.mrb[0].mxu0
    %v1785 = vadd.f32 %v1539, %v1784
    %v1786 = vpop.f32.mrb[0].mxu0
    %v1787 = vadd.f32 %v1543, %v1786
    %1788 = vmatprep.mubr.bf16.mxu0 %v1481
    %1789 = vmatmul.mubr.bf16.gmra.mrb[0].mxu0 %v1480
    %v1790 = vpop.f32.mrb[0].mxu0
    %v1791 = vadd.f32 %v1539, %v1790
    %v1792 = vpop.f32.mrb[0].mxu0
    %v1793 = vadd.f32 %v1543, %v1792
    %v1794 = vpop.f32.mrb[0].mxu0
    %v1795 = vadd.f32 %v1539, %v1794
    %v1796 = vpop.f32.mrb[0].mxu0
    %v1797 = vadd.f32 %v1543, %v1796
    %1798 = vmatprep.mubr.bf16.mxu0 %v1483
    %1799 = vmatmul.mubr.bf16.gmra.mrb[0].mxu0 %v1482
    %v1800 = vpop.f32.mrb[0].mxu0
    %v1801 = vadd.f32 %v1539, %v1800
    %v1802 = vpop.f32.mrb[0].mxu0
    %v1803 = vadd.f32 %v1543, %v1802
    %v1804 = vpop.f32.mrb[0].mxu0
    %v1805 = vadd.f32 %v1539, %v1804
    %v1806 = vpop.f32.mrb[0].mxu0
    %v1807 = vadd.f32 %v1543, %v1806
    %1808 = vmatprep.mubr.bf16.mxu0 %v1485
    %1809 = vmatmul.mubr.bf16.gmra.mrb[0].mxu0 %v1484
    %v1810 = vpop.f32.mrb[0].mxu0
    %v1811 = vadd.f32 %v1539, %v1810
    %v1812 = vpop.f32.mrb[0].mxu0
    %v1813 = vadd.f32 %v1543, %v1812
    %v1814 = vpop.f32.mrb[0].mxu0
    %v1815 = vadd.f32 %v1539, %v1814
    %v1816 = vpop.f32.mrb[0].mxu0
    %v1817 = vadd.f32 %v1543, %v1816
    %1818 = vmatprep.mubr.bf16.mxu0 %v1487
    %1819 = vmatmul.mubr.bf16.gmra.mrb[0].mxu0 %v1486
    %v1820 = vpop.f32.mrb[0].mxu0
    %v1821 = vadd.f32 %v1539, %v1820
    %v1822 = vpop.f32.mrb[0].mxu0
    %v1823 = vadd.f32 %v1543, %v1822
    %v1824 = vpop.f32.mrb[0].mxu0
    %v1825 = vadd.f32 %v1539, %v1824
    %v1826 = vpop.f32.mrb[0].mxu0
    %v1827 = vadd.f32 %v1543, %v1826
    %1828 = vmatprep.mubr.bf16.mxu0 %v1489
    %1829 = vmatmul.mubr.bf16.gmra.mrb[0].mxu0 %v1488
    %v1830 = vpop.f32.mrb[0].mxu0
    %v1831 = vadd.f32 %v1539, %v1830
    %v1832 = vpop.f32.mrb[0].mxu0
    %v1833 = vadd.f32 %v1543, %v1832
    %v1834 = vpop.f32.mrb[0].mxu0
    %v1835 = vadd.f32 %v1539, %v1834
    %v1836 = vpop.f32.mrb[0].mxu0
    %v1837 = vadd.f32 %v1543, %v1836
    %1838 = vmatprep.mubr.bf16.mxu0 %v1491
    %1839 = vmatmul.mubr.bf16.gmra.mrb[0].mxu0 %v1490
    %v1840 = vpop.f32.mrb[0].mxu0
    %v1841 = vadd.f32 %v1539, %v1840
    %v1842 = vpop.f32.mrb[0].mxu0
    %v1843 = vadd.f32 %v1543, %v1842
    %v1844 = vpop.f32.mrb[0].mxu0
    %v1845 = vadd.f32 %v1539, %v1844
    %v1846 = vpop.f32.mrb[0].mxu0
    %v1847 = vadd.f32 %v1543, %v1846
    %1848 = vmatprep.mubr.bf16.mxu0 %v1493
    %1849 = vmatmul.mubr.bf16.gmra.mrb[0].mxu0 %v1492
    %v1850 = vpop.f32.mrb[0].mxu0
    %v1851 = vadd.f32 %v1539, %v1850
    %v1852 = vpop.f32.mrb[0].mxu0
    %v1853 = vadd.f32 %v1543, %v1852
    %v1854 = vpop.f32.mrb[0].mxu0
    %v1855 = vadd.f32 %v1539, %v1854
    %v1856 = vpop.f32.mrb[0].mxu0
    %v1857 = vadd.f32 %v1543, %v1856
    %1858 = vmatprep.mubr.bf16.mxu0 %v1495
    %1859 = vmatmul.mubr.bf16.gmra.mrb[0].mxu0 %v1494
    %v1860 = vpop.f32.mrb[0].mxu0
    %v1861 = vadd.f32 %v1539, %v1860
    %v1862 = vpop.f32.mrb[0].mxu0
    %v1863 = vadd.f32 %v1543, %v1862
    %v1864 = vpop.f32.mrb[0].mxu0
    %v1865 = vadd.f32 %v1539, %v1864
    %v1866 = vpop.f32.mrb[0].mxu0
    %v1867 = vadd.f32 %v1543, %v1866
    %1868 = vmatprep.mubr.bf16.mxu0 %v1497
    %1869 = vmatmul.mubr.bf16.gmra.mrb[0].mxu0 %v1496
    %v1870 = vpop.f32.mrb[0].mxu0
    %v1871 = vadd.f32 %v1539, %v1870
    %v1872 = vpop.f32.mrb[0].mxu0
    %v1873 = vadd.f32 %v1543, %v1872
    %v1874 = vpop.f32.mrb[0].mxu0
    %v1875 = vadd.f32 %v1539, %v1874
    %v1876 = vpop.f32.mrb[0].mxu0
    %v1877 = vadd.f32 %v1543, %v1876
    %1878 = vmatprep.mubr.bf16.mxu0 %v1499
    %1879 = vmatmul.mubr.bf16.gmra.mrb[0].mxu0 %v1498
    %v1880 = vpop.f32.mrb[0].mxu0
    %v1881 = vadd.f32 %v1539, %v1880
    %v1882 = vpop.f32.mrb[0].mxu0
    %v1883 = vadd.f32 %v1543, %v1882
    %v1884 = vpop.f32.mrb[0].mxu0
    %v1885 = vadd.f32 %v1539, %v1884
    %v1886 = vpop.f32.mrb[0].mxu0
    %v1887 = vadd.f32 %v1543, %v1886
    %1888 = vmatprep.mubr.bf16.mxu0 %v1501
    %1889 = vmatmul.mubr.bf16.gmra.mrb[0].mxu0 %v1500
    %v1890 = vpop.f32.mrb[0].mxu0
    %v1891 = vadd.f32 %v1539, %v1890
    %v1892 = vpop.f32.mrb[0].mxu0
    %v1893 = vadd.f32 %v1543, %v1892
    %v1894 = vpop.f32.mrb[0].mxu0
    %v1895 = vadd.f32 %v1539, %v1894
    %v1896 = vpop.f32.mrb[0].mxu0
    %v1897 = vadd.f32 %v1543, %v1896
    %1898 = vdwg.mxu0
    %v1899 = vmax.f32 %v1741, 0.0
    %v1900 = vmax.f32 %v1743, 0.0
    %v1901 = vmax.f32 %v1745, 0.0
    %v1902 = vmax.f32 %v1747, 0.0
    %v1903 = vmax.f32 %v1751, 0.0
    %v1904 = vmax.f32 %v1753, 0.0
    %v1905 = vmax.f32 %v1755, 0.0
    %v1906 = vmax.f32 %v1757, 0.0
    %v1907 = vmax.f32 %v1761, 0.0
    %v1908 = vmax.f32 %v1763, 0.0
    %v1909 = vmax.f32 %v1765, 0.0
    %v1910 = vmax.f32 %v1767, 0.0
    %v1911 = vmax.f32 %v1771, 0.0
    %v1912 = vmax.f32 %v1773, 0.0
    %v1913 = vmax.f32 %v1775, 0.0
    %v1914 = vmax.f32 %v1777, 0.0
    %v1915 = vmax.f32 %v1781, 0.0
    %v1916 = vmax.f32 %v1783, 0.0
    %v1917 = vmax.f32 %v1785, 0.0
    %v1918 = vmax.f32 %v1787, 0.0
    %v1919 = vmax.f32 %v1791, 0.0
    %v1920 = vmax.f32 %v1793, 0.0
    %v1921 = vmax.f32 %v1795, 0.0
    %v1922 = vmax.f32 %v1797, 0.0
    %v1923 = vmax.f32 %v1801, 0.0
    %v1924 = vmax.f32 %v1803, 0.0
    %v1925 = vmax.f32 %v1805, 0.0
    %v1926 = vmax.f32 %v1807, 0.0
    %v1927 = vmax.f32 %v1811, 0.0
    %v1928 = vmax.f32 %v1813, 0.0
    %v1929 = vmax.f32 %v1815, 0.0
    %v1930 = vmax.f32 %v1817, 0.0
    %v1931 = vmax.f32 %v1821, 0.0
    %v1932 = vmax.f32 %v1823, 0.0
    %v1933 = vmax.f32 %v1825, 0.0
    %v1934 = vmax.f32 %v1827, 0.0
    %v1935 = vmax.f32 %v1831, 0.0
    %v1936 = vmax.f32 %v1833, 0.0
    %v1937 = vmax.f32 %v1835, 0.0
    %v1938 = vmax.f32 %v1837, 0.0
    %v1939 = vmax.f32 %v1841, 0.0
    %v1940 = vmax.f32 %v1843, 0.0
    %v1941 = vmax.f32 %v1845, 0.0
    %v1942 = vmax.f32 %v1847, 0.0
    %v1943 = vmax.f32 %v1851, 0.0
    %v1944 = vmax.f32 %v1853, 0.0
    %v1945 = vmax.f32 %v1855, 0.0
    %v1946 = vmax.f32 %v1857, 0.0
    %v1947 = vmax.f32 %v1861, 0.0
    %v1948 = vmax.f32 %v1863, 0.0
    %v1949 = vmax.f32 %v1865, 0.0
    %v1950 = vmax.f32 %v1867, 0.0
    %v1951 = vmax.f32 %v1871, 0.0
    %v1952 = vmax.f32 %v1873, 0.0
    %v1953 = vmax.f32 %v1875, 0.0
    %v1954 = vmax.f32 %v1877, 0.0
    %v1955 = vmax.f32 %v1881, 0.0
    %v1956 = vmax.f32 %v1883, 0.0
    %v1957 = vmax.f32 %v1885, 0.0
    %v1958 = vmax.f32 %v1887, 0.0
    %v1959 = vmax.f32 %v1891, 0.0
    %v1960 = vmax.f32 %v1893, 0.0
    %v1961 = vmax.f32 %v1895, 0.0
    %v1962 = vmax.f32 %v1897, 0.0
    %v1963 = vpack.c.bf16 %v1901, %v1899
    %v1964 = vpack.c.bf16 %v1902, %v1900
    %v1965 = vpack.c.bf16 %v1905, %v1903
    %v1966 = vpack.c.bf16 %v1906, %v1904
    %v1967 = vpack.c.bf16 %v1909, %v1907
    %v1968 = vpack.c.bf16 %v1910, %v1908
    %v1969 = vpack.c.bf16 %v1913, %v1911
    %v1970 = vpack.c.bf16 %v1914, %v1912
    %v1971 = vpack.c.bf16 %v1917, %v1915
    %v1972 = vpack.c.bf16 %v1918, %v1916
    %v1973 = vpack.c.bf16 %v1921, %v1919
    %v1974 = vpack.c.bf16 %v1922, %v1920
    %v1975 = vpack.c.bf16 %v1925, %v1923
    %v1976 = vpack.c.bf16 %v1926, %v1924
    %v1977 = vpack.c.bf16 %v1929, %v1927
    %v1978 = vpack.c.bf16 %v1930, %v1928
    %v1979 = vpack.c.bf16 %v1933, %v1931
    %v1980 = vpack.c.bf16 %v1934, %v1932
    %v1981 = vpack.c.bf16 %v1937, %v1935
    %v1982 = vpack.c.bf16 %v1938, %v1936
    %v1983 = vpack.c.bf16 %v1941, %v1939
    %v1984 = vpack.c.bf16 %v1942, %v1940
    %v1985 = vpack.c.bf16 %v1945, %v1943
    %v1986 = vpack.c.bf16 %v1946, %v1944
    %v1987 = vpack.c.bf16 %v1949, %v1947
    %v1988 = vpack.c.bf16 %v1950, %v1948
    %v1989 = vpack.c.bf16 %v1953, %v1951
    %v1990 = vpack.c.bf16 %v1954, %v1952
    %v1991 = vpack.c.bf16 %v1957, %v1955
    %v1992 = vpack.c.bf16 %v1958, %v1956
    %v1993 = vpack.c.bf16 %v1961, %v1959
    %v1994 = vpack.c.bf16 %v1962, %v1960
    %v1995 = vld [vmem:[#allocation7] sm:$0xff]
    %v1996 = vld [vmem:[#allocation7 + $0x8] sm:$0xff]
    %v1997 = vld [vmem:[#allocation7 + $0x10] sm:$0xff]
    %v1998 = vld [vmem:[#allocation7 + $0x18] sm:$0xff]
    %v1999 = vld [vmem:[#allocation7 + $0x20] sm:$0xff]
    %v2000 = vld [vmem:[#allocation7 + $0x28] sm:$0xff]
    %v2001 = vld [vmem:[#allocation7 + $0x30] sm:$0xff]
    %v2002 = vld [vmem:[#allocation7 + $0x38] sm:$0xff]
    %v2003 = vld [vmem:[#allocation7 + $0x40] sm:$0xff]
    %v2004 = vld [vmem:[#allocation7 + $0x48] sm:$0xff]
    %v2005 = vld [vmem:[#allocation7 + $0x50] sm:$0xff]
    %v2006 = vld [vmem:[#allocation7 + $0x58] sm:$0xff]
    %v2007 = vld [vmem:[#allocation7 + $0x60] sm:$0xff]
    %v2008 = vld [vmem:[#allocation7 + $0x68] sm:$0xff]
    %v2009 = vld [vmem:[#allocation7 + $0x70] sm:$0xff]
    %v2010 = vld [vmem:[#allocation7 + $0x78] sm:$0xff]
    %v2011 = vld [vmem:[#allocation7 + $0x80] sm:$0xff]
    %v2012 = vld [vmem:[#allocation7 + $0x88] sm:$0xff]
    %v2013 = vld [vmem:[#allocation7 + $0x90] sm:$0xff]
    %v2014 = vld [vmem:[#allocation7 + $0x98] sm:$0xff]
    %v2015 = vld [vmem:[#allocation7 + $0xa0] sm:$0xff]
    %v2016 = vld [vmem:[#allocation7 + $0xa8] sm:$0xff]
    %v2017 = vld [vmem:[#allocation7 + $0xb0] sm:$0xff]
    %v2018 = vld [vmem:[#allocation7 + $0xb8] sm:$0xff]
    %v2019 = vld [vmem:[#allocation7 + $0xc0] sm:$0xff]
    %v2020 = vld [vmem:[#allocation7 + $0xc8] sm:$0xff]
    %v2021 = vld [vmem:[#allocation7 + $0xd0] sm:$0xff]
    %v2022 = vld [vmem:[#allocation7 + $0xd8] sm:$0xff]
    %v2023 = vld [vmem:[#allocation7 + $0xe0] sm:$0xff]
    %v2024 = vld [vmem:[#allocation7 + $0xe8] sm:$0xff]
    %v2025 = vld [vmem:[#allocation7 + $0xf0] sm:$0xff]
    %v2026 = vld [vmem:[#allocation7 + $0xf8] sm:$0xff]
    %v2027 = vld [vmem:[%s10] sm:$0x3]
    %v2029 = vlaneseq
    %v2030 = vshrl.u32 %v2029, 7
    %v2031 = vsub.s32 0, %v2030
    %v2032 = vrot.slane %v2027, %v2031
    %v2033 = vlaneseq
    %v2034 = vshrl.u32 %v2033, 7
    %v2035 = vsub.s32 1, %v2034
    %v2036 = vrot.slane %v2027, %v2035
    %v2071 = vunpack.c.l.b16 %v1995
    %v2072 = vunpack.c.h.b16 %v1995
    %v2073 = vunpack.c.l.b16 %v1996
    %v2074 = vunpack.c.h.b16 %v1996
    %v2075 = vunpack.c.l.b16 %v1997
    %v2076 = vunpack.c.h.b16 %v1997
    %v2077 = vunpack.c.l.b16 %v1998
    %v2078 = vunpack.c.h.b16 %v1998
    %v2079 = vunpack.c.l.b16 %v1999
    %v2080 = vunpack.c.h.b16 %v1999
    %v2081 = vunpack.c.l.b16 %v2000
    %v2082 = vunpack.c.h.b16 %v2000
    %v2083 = vunpack.c.l.b16 %v2001
    %v2084 = vunpack.c.h.b16 %v2001
    %v2085 = vunpack.c.l.b16 %v2002
    %v2086 = vunpack.c.h.b16 %v2002
    %v2087 = vunpack.c.l.b16 %v2003
    %v2088 = vunpack.c.h.b16 %v2003
    %v2089 = vunpack.c.l.b16 %v2004
    %v2090 = vunpack.c.h.b16 %v2004
    %v2091 = vunpack.c.l.b16 %v2005
    %v2092 = vunpack.c.h.b16 %v2005
    %v2093 = vunpack.c.l.b16 %v2006
    %v2094 = vunpack.c.h.b16 %v2006
    %v2095 = vunpack.c.l.b16 %v2007
    %v2096 = vunpack.c.h.b16 %v2007
    %v2097 = vunpack.c.l.b16 %v2008
    %v2098 = vunpack.c.h.b16 %v2008
    %v2099 = vunpack.c.l.b16 %v2009
    %v2100 = vunpack.c.h.b16 %v2009
    %v2101 = vunpack.c.l.b16 %v2010
    %v2102 = vunpack.c.h.b16 %v2010
    %v2103 = vunpack.c.l.b16 %v2011
    %v2104 = vunpack.c.h.b16 %v2011
    %v2105 = vunpack.c.l.b16 %v2012
    %v2106 = vunpack.c.h.b16 %v2012
    %v2107 = vunpack.c.l.b16 %v2013
    %v2108 = vunpack.c.h.b16 %v2013
    %v2109 = vunpack.c.l.b16 %v2014
    %v2110 = vunpack.c.h.b16 %v2014
    %v2111 = vunpack.c.l.b16 %v2015
    %v2112 = vunpack.c.h.b16 %v2015
    %v2113 = vunpack.c.l.b16 %v2016
    %v2114 = vunpack.c.h.b16 %v2016
    %v2115 = vunpack.c.l.b16 %v2017
    %v2116 = vunpack.c.h.b16 %v2017
    %v2117 = vunpack.c.l.b16 %v2018
    %v2118 = vunpack.c.h.b16 %v2018
    %v2119 = vunpack.c.l.b16 %v2019
    %v2120 = vunpack.c.h.b16 %v2019
    %v2121 = vunpack.c.l.b16 %v2020
    %v2122 = vunpack.c.h.b16 %v2020
    %v2123 = vunpack.c.l.b16 %v2021
    %v2124 = vunpack.c.h.b16 %v2021
    %v2125 = vunpack.c.l.b16 %v2022
    %v2126 = vunpack.c.h.b16 %v2022
    %v2127 = vunpack.c.l.b16 %v2023
    %v2128 = vunpack.c.h.b16 %v2023
    %v2129 = vunpack.c.l.b16 %v2024
    %v2130 = vunpack.c.h.b16 %v2024
    %v2131 = vunpack.c.l.b16 %v2025
    %v2132 = vunpack.c.h.b16 %v2025
    %v2133 = vunpack.c.l.b16 %v2026
    %v2134 = vunpack.c.h.b16 %v2026
    %v2135 = vpack.c.b16 %v2073, %v2071
    %v2136 = vpack.c.b16 %v2074, %v2072
    %v2137 = vpack.c.b16 %v2077, %v2075
    %v2138 = vpack.c.b16 %v2078, %v2076
    %v2139 = vpack.c.b16 %v2081, %v2079
    %v2140 = vpack.c.b16 %v2082, %v2080
    %v2141 = vpack.c.b16 %v2085, %v2083
    %v2142 = vpack.c.b16 %v2086, %v2084
    %v2143 = vpack.c.b16 %v2089, %v2087
    %v2144 = vpack.c.b16 %v2090, %v2088
    %v2145 = vpack.c.b16 %v2093, %v2091
    %v2146 = vpack.c.b16 %v2094, %v2092
    %v2147 = vpack.c.b16 %v2097, %v2095
    %v2148 = vpack.c.b16 %v2098, %v2096
    %v2149 = vpack.c.b16 %v2101, %v2099
    %v2150 = vpack.c.b16 %v2102, %v2100
    %v2151 = vpack.c.b16 %v2105, %v2103
    %v2152 = vpack.c.b16 %v2106, %v2104
    %v2153 = vpack.c.b16 %v2109, %v2107
    %v2154 = vpack.c.b16 %v2110, %v2108
    %v2155 = vpack.c.b16 %v2113, %v2111
    %v2156 = vpack.c.b16 %v2114, %v2112
    %v2157 = vpack.c.b16 %v2117, %v2115
    %v2158 = vpack.c.b16 %v2118, %v2116
    %v2159 = vpack.c.b16 %v2121, %v2119
    %v2160 = vpack.c.b16 %v2122, %v2120
    %v2161 = vpack.c.b16 %v2125, %v2123
    %v2162 = vpack.c.b16 %v2126, %v2124
    %v2163 = vpack.c.b16 %v2129, %v2127
    %v2164 = vpack.c.b16 %v2130, %v2128
    %v2165 = vpack.c.b16 %v2133, %v2131
    %v2166 = vpack.c.b16 %v2134, %v2132
    %2199 = vmatprep.subr.bf16.mxu0 %v2136
    %2200 = vmatpush1.bf16.msra.mxu0 %v2135
    %2201 = vmatprep.subr.bf16.mxu0 %v2138
    %2202 = vmatpush1.bf16.msra.mxu0 %v2137
    %2203 = vmatprep.subr.bf16.mxu0 %v2140
    %2204 = vmatpush1.bf16.msra.mxu0 %v2139
    %2205 = vmatprep.subr.bf16.mxu0 %v2142
    %2206 = vmatpush1.bf16.msra.mxu0 %v2141
    %2207 = vmatprep.subr.bf16.mxu0 %v2144
    %2208 = vmatpush1.bf16.msra.mxu0 %v2143
    %2209 = vmatprep.subr.bf16.mxu0 %v2146
    %2210 = vmatpush1.bf16.msra.mxu0 %v2145
    %2211 = vmatprep.subr.bf16.mxu0 %v2148
    %2212 = vmatpush1.bf16.msra.mxu0 %v2147
    %2213 = vmatprep.subr.bf16.mxu0 %v2150
    %2214 = vmatpush1.bf16.msra.mxu0 %v2149
    %2215 = vmatprep.subr.bf16.mxu0 %v2152
    %2216 = vmatpush1.bf16.msra.mxu0 %v2151
    %2217 = vmatprep.subr.bf16.mxu0 %v2154
    %2218 = vmatpush1.bf16.msra.mxu0 %v2153
    %2219 = vmatprep.subr.bf16.mxu0 %v2156
    %2220 = vmatpush1.bf16.msra.mxu0 %v2155
    %2221 = vmatprep.subr.bf16.mxu0 %v2158
    %2222 = vmatpush1.bf16.msra.mxu0 %v2157
    %2223 = vmatprep.subr.bf16.mxu0 %v2160
    %2224 = vmatpush1.bf16.msra.mxu0 %v2159
    %2225 = vmatprep.subr.bf16.mxu0 %v2162
    %2226 = vmatpush1.bf16.msra.mxu0 %v2161
    %2227 = vmatprep.subr.bf16.mxu0 %v2164
    %2228 = vmatpush1.bf16.msra.mxu0 %v2163
    %2229 = vmatprep.subr.bf16.mxu0 %v2166
    %2230 = vmatpush1.bf16.msra.mxu0 %v2165
    %2231 = vmatprep.mubr.bf16.mxu0 %v1964
    %2232 = vmatmul.mubr.bf16.gmra.mrb[0].mxu0 %v1963
    %v2233 = vpop.f32.mrb[0].mxu0
    %v2234 = vadd.f32 %v2032, %v2233
    %v2235 = vpop.f32.mrb[0].mxu0
    %v2236 = vadd.f32 %v2036, %v2235
    %v2237 = vpop.f32.mrb[0].mxu0
    %v2238 = vadd.f32 %v2032, %v2237
    %v2239 = vpop.f32.mrb[0].mxu0
    %v2240 = vadd.f32 %v2036, %v2239
    %2241 = vmatprep.mubr.bf16.mxu0 %v1966
    %2242 = vmatmul.mubr.bf16.gmra.mrb[0].mxu0 %v1965
    %v2243 = vpop.f32.mrb[0].mxu0
    %v2244 = vadd.f32 %v2032, %v2243
    %v2245 = vpop.f32.mrb[0].mxu0
    %v2246 = vadd.f32 %v2036, %v2245
    %v2247 = vpop.f32.mrb[0].mxu0
    %v2248 = vadd.f32 %v2032, %v2247
    %v2249 = vpop.f32.mrb[0].mxu0
    %v2250 = vadd.f32 %v2036, %v2249
    %2251 = vmatprep.mubr.bf16.mxu0 %v1968
    %2252 = vmatmul.mubr.bf16.gmra.mrb[0].mxu0 %v1967
    %v2253 = vpop.f32.mrb[0].mxu0
    %v2254 = vadd.f32 %v2032, %v2253
    %v2255 = vpop.f32.mrb[0].mxu0
    %v2256 = vadd.f32 %v2036, %v2255
    %v2257 = vpop.f32.mrb[0].mxu0
    %v2258 = vadd.f32 %v2032, %v2257
    %v2259 = vpop.f32.mrb[0].mxu0
    %v2260 = vadd.f32 %v2036, %v2259
    %2261 = vmatprep.mubr.bf16.mxu0 %v1970
    %2262 = vmatmul.mubr.bf16.gmra.mrb[0].mxu0 %v1969
    %v2263 = vpop.f32.mrb[0].mxu0
    %v2264 = vadd.f32 %v2032, %v2263
    %v2265 = vpop.f32.mrb[0].mxu0
    %v2266 = vadd.f32 %v2036, %v2265
    %v2267 = vpop.f32.mrb[0].mxu0
    %v2268 = vadd.f32 %v2032, %v2267
    %v2269 = vpop.f32.mrb[0].mxu0
    %v2270 = vadd.f32 %v2036, %v2269
    %2271 = vmatprep.mubr.bf16.mxu0 %v1972
    %2272 = vmatmul.mubr.bf16.gmra.mrb[0].mxu0 %v1971
    %v2273 = vpop.f32.mrb[0].mxu0
    %v2274 = vadd.f32 %v2032, %v2273
    %v2275 = vpop.f32.mrb[0].mxu0
    %v2276 = vadd.f32 %v2036, %v2275
    %v2277 = vpop.f32.mrb[0].mxu0
    %v2278 = vadd.f32 %v2032, %v2277
    %v2279 = vpop.f32.mrb[0].mxu0
    %v2280 = vadd.f32 %v2036, %v2279
    %2281 = vmatprep.mubr.bf16.mxu0 %v1974
    %2282 = vmatmul.mubr.bf16.gmra.mrb[0].mxu0 %v1973
    %v2283 = vpop.f32.mrb[0].mxu0
    %v2284 = vadd.f32 %v2032, %v2283
    %v2285 = vpop.f32.mrb[0].mxu0
    %v2286 = vadd.f32 %v2036, %v2285
    %v2287 = vpop.f32.mrb[0].mxu0
    %v2288 = vadd.f32 %v2032, %v2287
    %v2289 = vpop.f32.mrb[0].mxu0
    %v2290 = vadd.f32 %v2036, %v2289
    %2291 = vmatprep.mubr.bf16.mxu0 %v1976
    %2292 = vmatmul.mubr.bf16.gmra.mrb[0].mxu0 %v1975
    %v2293 = vpop.f32.mrb[0].mxu0
    %v2294 = vadd.f32 %v2032, %v2293
    %v2295 = vpop.f32.mrb[0].mxu0
    %v2296 = vadd.f32 %v2036, %v2295
    %v2297 = vpop.f32.mrb[0].mxu0
    %v2298 = vadd.f32 %v2032, %v2297
    %v2299 = vpop.f32.mrb[0].mxu0
    %v2300 = vadd.f32 %v2036, %v2299
    %2301 = vmatprep.mubr.bf16.mxu0 %v1978
    %2302 = vmatmul.mubr.bf16.gmra.mrb[0].mxu0 %v1977
    %v2303 = vpop.f32.mrb[0].mxu0
    %v2304 = vadd.f32 %v2032, %v2303
    %v2305 = vpop.f32.mrb[0].mxu0
    %v2306 = vadd.f32 %v2036, %v2305
    %v2307 = vpop.f32.mrb[0].mxu0
    %v2308 = vadd.f32 %v2032, %v2307
    %v2309 = vpop.f32.mrb[0].mxu0
    %v2310 = vadd.f32 %v2036, %v2309
    %2311 = vmatprep.mubr.bf16.mxu0 %v1980
    %2312 = vmatmul.mubr.bf16.gmra.mrb[0].mxu0 %v1979
    %v2313 = vpop.f32.mrb[0].mxu0
    %v2314 = vadd.f32 %v2032, %v2313
    %v2315 = vpop.f32.mrb[0].mxu0
    %v2316 = vadd.f32 %v2036, %v2315
    %v2317 = vpop.f32.mrb[0].mxu0
    %v2318 = vadd.f32 %v2032, %v2317
    %v2319 = vpop.f32.mrb[0].mxu0
    %v2320 = vadd.f32 %v2036, %v2319
    %2321 = vmatprep.mubr.bf16.mxu0 %v1982
    %2322 = vmatmul.mubr.bf16.gmra.mrb[0].mxu0 %v1981
    %v2323 = vpop.f32.mrb[0].mxu0
    %v2324 = vadd.f32 %v2032, %v2323
    %v2325 = vpop.f32.mrb[0].mxu0
    %v2326 = vadd.f32 %v2036, %v2325
    %v2327 = vpop.f32.mrb[0].mxu0
    %v2328 = vadd.f32 %v2032, %v2327
    %v2329 = vpop.f32.mrb[0].mxu0
    %v2330 = vadd.f32 %v2036, %v2329
    %2331 = vmatprep.mubr.bf16.mxu0 %v1984
    %2332 = vmatmul.mubr.bf16.gmra.mrb[0].mxu0 %v1983
    %v2333 = vpop.f32.mrb[0].mxu0
    %v2334 = vadd.f32 %v2032, %v2333
    %v2335 = vpop.f32.mrb[0].mxu0
    %v2336 = vadd.f32 %v2036, %v2335
    %v2337 = vpop.f32.mrb[0].mxu0
    %v2338 = vadd.f32 %v2032, %v2337
    %v2339 = vpop.f32.mrb[0].mxu0
    %v2340 = vadd.f32 %v2036, %v2339
    %2341 = vmatprep.mubr.bf16.mxu0 %v1986
    %2342 = vmatmul.mubr.bf16.gmra.mrb[0].mxu0 %v1985
    %v2343 = vpop.f32.mrb[0].mxu0
    %v2344 = vadd.f32 %v2032, %v2343
    %v2345 = vpop.f32.mrb[0].mxu0
    %v2346 = vadd.f32 %v2036, %v2345
    %v2347 = vpop.f32.mrb[0].mxu0
    %v2348 = vadd.f32 %v2032, %v2347
    %v2349 = vpop.f32.mrb[0].mxu0
    %v2350 = vadd.f32 %v2036, %v2349
    %2351 = vmatprep.mubr.bf16.mxu0 %v1988
    %2352 = vmatmul.mubr.bf16.gmra.mrb[0].mxu0 %v1987
    %v2353 = vpop.f32.mrb[0].mxu0
    %v2354 = vadd.f32 %v2032, %v2353
    %v2355 = vpop.f32.mrb[0].mxu0
    %v2356 = vadd.f32 %v2036, %v2355
    %v2357 = vpop.f32.mrb[0].mxu0
    %v2358 = vadd.f32 %v2032, %v2357
    %v2359 = vpop.f32.mrb[0].mxu0
    %v2360 = vadd.f32 %v2036, %v2359
    %2361 = vmatprep.mubr.bf16.mxu0 %v1990
    %2362 = vmatmul.mubr.bf16.gmra.mrb[0].mxu0 %v1989
    %v2363 = vpop.f32.mrb[0].mxu0
    %v2364 = vadd.f32 %v2032, %v2363
    %v2365 = vpop.f32.mrb[0].mxu0
    %v2366 = vadd.f32 %v2036, %v2365
    %v2367 = vpop.f32.mrb[0].mxu0
    %v2368 = vadd.f32 %v2032, %v2367
    %v2369 = vpop.f32.mrb[0].mxu0
    %v2370 = vadd.f32 %v2036, %v2369
    %2371 = vmatprep.mubr.bf16.mxu0 %v1992
    %2372 = vmatmul.mubr.bf16.gmra.mrb[0].mxu0 %v1991
    %v2373 = vpop.f32.mrb[0].mxu0
    %v2374 = vadd.f32 %v2032, %v2373
    %v2375 = vpop.f32.mrb[0].mxu0
    %v2376 = vadd.f32 %v2036, %v2375
    %v2377 = vpop.f32.mrb[0].mxu0
    %v2378 = vadd.f32 %v2032, %v2377
    %v2379 = vpop.f32.mrb[0].mxu0
    %v2380 = vadd.f32 %v2036, %v2379
    %2381 = vmatprep.mubr.bf16.mxu0 %v1994
    %2382 = vmatmul.mubr.bf16.gmra.mrb[0].mxu0 %v1993
    %v2383 = vpop.f32.mrb[0].mxu0
    %v2384 = vadd.f32 %v2032, %v2383
    %v2385 = vpop.f32.mrb[0].mxu0
    %v2386 = vadd.f32 %v2036, %v2385
    %v2387 = vpop.f32.mrb[0].mxu0
    %v2388 = vadd.f32 %v2032, %v2387
    %v2389 = vpop.f32.mrb[0].mxu0
    %v2390 = vadd.f32 %v2036, %v2389
    %2391 = vdwg.mxu0
    %v2392 = vmax.f32 %v2234, 0.0
    %v2393 = vmax.f32 %v2236, 0.0
    %v2394 = vmax.f32 %v2238, 0.0
    %v2395 = vmax.f32 %v2240, 0.0
    %v2396 = vmax.f32 %v2244, 0.0
    %v2397 = vmax.f32 %v2246, 0.0
    %v2398 = vmax.f32 %v2248, 0.0
    %v2399 = vmax.f32 %v2250, 0.0
    %v2400 = vmax.f32 %v2254, 0.0
    %v2401 = vmax.f32 %v2256, 0.0
    %v2402 = vmax.f32 %v2258, 0.0
    %v2403 = vmax.f32 %v2260, 0.0
    %v2404 = vmax.f32 %v2264, 0.0
    %v2405 = vmax.f32 %v2266, 0.0
    %v2406 = vmax.f32 %v2268, 0.0
    %v2407 = vmax.f32 %v2270, 0.0
    %v2408 = vmax.f32 %v2274, 0.0
    %v2409 = vmax.f32 %v2276, 0.0
    %v2410 = vmax.f32 %v2278, 0.0
    %v2411 = vmax.f32 %v2280, 0.0
    %v2412 = vmax.f32 %v2284, 0.0
    %v2413 = vmax.f32 %v2286, 0.0
    %v2414 = vmax.f32 %v2288, 0.0
    %v2415 = vmax.f32 %v2290, 0.0
    %v2416 = vmax.f32 %v2294, 0.0
    %v2417 = vmax.f32 %v2296, 0.0
    %v2418 = vmax.f32 %v2298, 0.0
    %v2419 = vmax.f32 %v2300, 0.0
    %v2420 = vmax.f32 %v2304, 0.0
    %v2421 = vmax.f32 %v2306, 0.0
    %v2422 = vmax.f32 %v2308, 0.0
    %v2423 = vmax.f32 %v2310, 0.0
    %v2424 = vmax.f32 %v2314, 0.0
    %v2425 = vmax.f32 %v2316, 0.0
    %v2426 = vmax.f32 %v2318, 0.0
    %v2427 = vmax.f32 %v2320, 0.0
    %v2428 = vmax.f32 %v2324, 0.0
    %v2429 = vmax.f32 %v2326, 0.0
    %v2430 = vmax.f32 %v2328, 0.0
    %v2431 = vmax.f32 %v2330, 0.0
    %v2432 = vmax.f32 %v2334, 0.0
    %v2433 = vmax.f32 %v2336, 0.0
    %v2434 = vmax.f32 %v2338, 0.0
    %v2435 = vmax.f32 %v2340, 0.0
    %v2436 = vmax.f32 %v2344, 0.0
    %v2437 = vmax.f32 %v2346, 0.0
    %v2438 = vmax.f32 %v2348, 0.0
    %v2439 = vmax.f32 %v2350, 0.0
    %v2440 = vmax.f32 %v2354, 0.0
    %v2441 = vmax.f32 %v2356, 0.0
    %v2442 = vmax.f32 %v2358, 0.0
    %v2443 = vmax.f32 %v2360, 0.0
    %v2444 = vmax.f32 %v2364, 0.0
    %v2445 = vmax.f32 %v2366, 0.0
    %v2446 = vmax.f32 %v2368, 0.0
    %v2447 = vmax.f32 %v2370, 0.0
    %v2448 = vmax.f32 %v2374, 0.0
    %v2449 = vmax.f32 %v2376, 0.0
    %v2450 = vmax.f32 %v2378, 0.0
    %v2451 = vmax.f32 %v2380, 0.0
    %v2452 = vmax.f32 %v2384, 0.0
    %v2453 = vmax.f32 %v2386, 0.0
    %v2454 = vmax.f32 %v2388, 0.0
    %v2455 = vmax.f32 %v2390, 0.0
    %v2456 = vpack.c.bf16 %v2394, %v2392
    %v2457 = vpack.c.bf16 %v2395, %v2393
    %v2458 = vpack.c.bf16 %v2398, %v2396
    %v2459 = vpack.c.bf16 %v2399, %v2397
    %v2460 = vpack.c.bf16 %v2402, %v2400
    %v2461 = vpack.c.bf16 %v2403, %v2401
    %v2462 = vpack.c.bf16 %v2406, %v2404
    %v2463 = vpack.c.bf16 %v2407, %v2405
    %v2464 = vpack.c.bf16 %v2410, %v2408
    %v2465 = vpack.c.bf16 %v2411, %v2409
    %v2466 = vpack.c.bf16 %v2414, %v2412
    %v2467 = vpack.c.bf16 %v2415, %v2413
    %v2468 = vpack.c.bf16 %v2418, %v2416
    %v2469 = vpack.c.bf16 %v2419, %v2417
    %v2470 = vpack.c.bf16 %v2422, %v2420
    %v2471 = vpack.c.bf16 %v2423, %v2421
    %v2472 = vpack.c.bf16 %v2426, %v2424
    %v2473 = vpack.c.bf16 %v2427, %v2425
    %v2474 = vpack.c.bf16 %v2430, %v2428
    %v2475 = vpack.c.bf16 %v2431, %v2429
    %v2476 = vpack.c.bf16 %v2434, %v2432
    %v2477 = vpack.c.bf16 %v2435, %v2433
    %v2478 = vpack.c.bf16 %v2438, %v2436
    %v2479 = vpack.c.bf16 %v2439, %v2437
    %v2480 = vpack.c.bf16 %v2442, %v2440
    %v2481 = vpack.c.bf16 %v2443, %v2441
    %v2482 = vpack.c.bf16 %v2446, %v2444
    %v2483 = vpack.c.bf16 %v2447, %v2445
    %v2484 = vpack.c.bf16 %v2450, %v2448
    %v2485 = vpack.c.bf16 %v2451, %v2449
    %v2486 = vpack.c.bf16 %v2454, %v2452
    %v2487 = vpack.c.bf16 %v2455, %v2453
    %v2488 = vld [vmem:[#allocation8] sm:$0xf]
    %v2489 = vld [vmem:[#allocation8 + $0x4] sm:$0xf]
    %v2490 = vld [vmem:[#allocation8 + $0x8] sm:$0xf]
    %v2491 = vld [vmem:[#allocation8 + $0xc] sm:$0xf]
    %v2492 = vld [vmem:[#allocation8 + $0x10] sm:$0xf]
    %v2493 = vld [vmem:[#allocation8 + $0x14] sm:$0xf]
    %v2494 = vld [vmem:[#allocation8 + $0x18] sm:$0xf]
    %v2495 = vld [vmem:[#allocation8 + $0x1c] sm:$0xf]
    %v2496 = vld [vmem:[#allocation8 + $0x20] sm:$0xf]
    %v2497 = vld [vmem:[#allocation8 + $0x24] sm:$0xf]
    %v2498 = vld [vmem:[#allocation8 + $0x28] sm:$0xf]
    %v2499 = vld [vmem:[#allocation8 + $0x2c] sm:$0xf]
    %v2500 = vld [vmem:[#allocation8 + $0x30] sm:$0xf]
    %v2501 = vld [vmem:[#allocation8 + $0x34] sm:$0xf]
    %v2502 = vld [vmem:[#allocation8 + $0x38] sm:$0xf]
    %v2503 = vld [vmem:[#allocation8 + $0x3c] sm:$0xf]
    %v2504 = vld [vmem:[#allocation8 + $0x40] sm:$0xf]
    %v2505 = vld [vmem:[#allocation8 + $0x44] sm:$0xf]
    %v2506 = vld [vmem:[#allocation8 + $0x48] sm:$0xf]
    %v2507 = vld [vmem:[#allocation8 + $0x4c] sm:$0xf]
    %v2508 = vld [vmem:[#allocation8 + $0x50] sm:$0xf]
    %v2509 = vld [vmem:[#allocation8 + $0x54] sm:$0xf]
    %v2510 = vld [vmem:[#allocation8 + $0x58] sm:$0xf]
    %v2511 = vld [vmem:[#allocation8 + $0x5c] sm:$0xf]
    %v2512 = vld [vmem:[#allocation8 + $0x60] sm:$0xf]
    %v2513 = vld [vmem:[#allocation8 + $0x64] sm:$0xf]
    %v2514 = vld [vmem:[#allocation8 + $0x68] sm:$0xf]
    %v2515 = vld [vmem:[#allocation8 + $0x6c] sm:$0xf]
    %v2516 = vld [vmem:[#allocation8 + $0x70] sm:$0xf]
    %v2517 = vld [vmem:[#allocation8 + $0x74] sm:$0xf]
    %v2518 = vld [vmem:[#allocation8 + $0x78] sm:$0xf]
    %v2519 = vld [vmem:[#allocation8 + $0x7c] sm:$0xf]
    %v2520 = vld [vmem:[%s12] sm:$0x1]
    %v2522 = vlaneseq
    %v2523 = vshrl.u32 %v2522, 7
    %v2524 = vsub.s32 0, %v2523
    %v2525 = vrot.slane %v2520, %v2524
    %v2559 = vunpack.c.l.b16 %v2488
    %v2560 = vunpack.c.l.b16 %v2489
    %v2561 = vunpack.c.l.b16 %v2490
    %v2562 = vunpack.c.l.b16 %v2491
    %v2563 = vunpack.c.l.b16 %v2492
    %v2564 = vunpack.c.l.b16 %v2493
    %v2565 = vunpack.c.l.b16 %v2494
    %v2566 = vunpack.c.l.b16 %v2495
    %v2567 = vunpack.c.l.b16 %v2496
    %v2568 = vunpack.c.l.b16 %v2497
    %v2569 = vunpack.c.l.b16 %v2498
    %v2570 = vunpack.c.l.b16 %v2499
    %v2571 = vunpack.c.l.b16 %v2500
    %v2572 = vunpack.c.l.b16 %v2501
    %v2573 = vunpack.c.l.b16 %v2502
    %v2574 = vunpack.c.l.b16 %v2503
    %v2575 = vunpack.c.l.b16 %v2504
    %v2576 = vunpack.c.l.b16 %v2505
    %v2577 = vunpack.c.l.b16 %v2506
    %v2578 = vunpack.c.l.b16 %v2507
    %v2579 = vunpack.c.l.b16 %v2508
    %v2580 = vunpack.c.l.b16 %v2509
    %v2581 = vunpack.c.l.b16 %v2510
    %v2582 = vunpack.c.l.b16 %v2511
    %v2583 = vunpack.c.l.b16 %v2512
    %v2584 = vunpack.c.l.b16 %v2513
    %v2585 = vunpack.c.l.b16 %v2514
    %v2586 = vunpack.c.l.b16 %v2515
    %v2587 = vunpack.c.l.b16 %v2516
    %v2588 = vunpack.c.l.b16 %v2517
    %v2589 = vunpack.c.l.b16 %v2518
    %v2590 = vunpack.c.l.b16 %v2519
    %v2591 = vpack.c.b16 %v2560, %v2559
    %v2592 = vpack.c.b16 %v2562, %v2561
    %v2593 = vpack.c.b16 %v2564, %v2563
    %v2594 = vpack.c.b16 %v2566, %v2565
    %v2595 = vpack.c.b16 %v2568, %v2567
    %v2596 = vpack.c.b16 %v2570, %v2569
    %v2597 = vpack.c.b16 %v2572, %v2571
    %v2598 = vpack.c.b16 %v2574, %v2573
    %v2599 = vpack.c.b16 %v2576, %v2575
    %v2600 = vpack.c.b16 %v2578, %v2577
    %v2601 = vpack.c.b16 %v2580, %v2579
    %v2602 = vpack.c.b16 %v2582, %v2581
    %v2603 = vpack.c.b16 %v2584, %v2583
    %v2604 = vpack.c.b16 %v2586, %v2585
    %v2605 = vpack.c.b16 %v2588, %v2587
    %v2606 = vpack.c.b16 %v2590, %v2589
    %2623 = vmatprep.subr.bf16.mxu0 0
    %2624 = vmatpush1.bf16.msra.mxu0 %v2591
    %2625 = vmatprep.subr.bf16.mxu0 0
    %2626 = vmatpush1.bf16.msra.mxu0 %v2592
    %2627 = vmatprep.subr.bf16.mxu0 0
    %2628 = vmatpush1.bf16.msra.mxu0 %v2593
    %2629 = vmatprep.subr.bf16.mxu0 0
    %2630 = vmatpush1.bf16.msra.mxu0 %v2594
    %2631 = vmatprep.subr.bf16.mxu0 0
    %2632 = vmatpush1.bf16.msra.mxu0 %v2595
    %2633 = vmatprep.subr.bf16.mxu0 0
    %2634 = vmatpush1.bf16.msra.mxu0 %v2596
    %2635 = vmatprep.subr.bf16.mxu0 0
    %2636 = vmatpush1.bf16.msra.mxu0 %v2597
    %2637 = vmatprep.subr.bf16.mxu0 0
    %2638 = vmatpush1.bf16.msra.mxu0 %v2598
    %2639 = vmatprep.subr.bf16.mxu0 0
    %2640 = vmatpush1.bf16.msra.mxu0 %v2599
    %2641 = vmatprep.subr.bf16.mxu0 0
    %2642 = vmatpush1.bf16.msra.mxu0 %v2600
    %2643 = vmatprep.subr.bf16.mxu0 0
    %2644 = vmatpush1.bf16.msra.mxu0 %v2601
    %2645 = vmatprep.subr.bf16.mxu0 0
    %2646 = vmatpush1.bf16.msra.mxu0 %v2602
    %2647 = vmatprep.subr.bf16.mxu0 0
    %2648 = vmatpush1.bf16.msra.mxu0 %v2603
    %2649 = vmatprep.subr.bf16.mxu0 0
    %2650 = vmatpush1.bf16.msra.mxu0 %v2604
    %2651 = vmatprep.subr.bf16.mxu0 0
    %2652 = vmatpush1.bf16.msra.mxu0 %v2605
    %2653 = vmatprep.subr.bf16.mxu0 0
    %2654 = vmatpush1.bf16.msra.mxu0 %v2606
    %2655 = vmatprep.mubr.bf16.mxu0 %v2457
    %2656 = vmatmul.mubr.bf16.gmra.mrb[0].mxu0 %v2456
    %v2657 = vpop.f32.mrb[0].mxu0
    %v2658 = vadd.f32 %v2525, %v2657
    %v2659 = vpop.f32.mrb[0].mxu0
    %v2660 = vpop.f32.mrb[0].mxu0
    %v2661 = vadd.f32 %v2525, %v2660
    %v2662 = vpop.f32.mrb[0].mxu0
    %2663 = vmatprep.mubr.bf16.mxu0 %v2459
    %2664 = vmatmul.mubr.bf16.gmra.mrb[0].mxu0 %v2458
    %v2665 = vpop.f32.mrb[0].mxu0
    %v2666 = vadd.f32 %v2525, %v2665
    %v2667 = vpop.f32.mrb[0].mxu0
    %v2668 = vpop.f32.mrb[0].mxu0
    %v2669 = vadd.f32 %v2525, %v2668
    %v2670 = vpop.f32.mrb[0].mxu0
    %2671 = vmatprep.mubr.bf16.mxu0 %v2461
    %2672 = vmatmul.mubr.bf16.gmra.mrb[0].mxu0 %v2460
    %v2673 = vpop.f32.mrb[0].mxu0
    %v2674 = vadd.f32 %v2525, %v2673
    %v2675 = vpop.f32.mrb[0].mxu0
    %v2676 = vpop.f32.mrb[0].mxu0
    %v2677 = vadd.f32 %v2525, %v2676
    %v2678 = vpop.f32.mrb[0].mxu0
    %2679 = vmatprep.mubr.bf16.mxu0 %v2463
    %2680 = vmatmul.mubr.bf16.gmra.mrb[0].mxu0 %v2462
    %v2681 = vpop.f32.mrb[0].mxu0
    %v2682 = vadd.f32 %v2525, %v2681
    %v2683 = vpop.f32.mrb[0].mxu0
    %v2684 = vpop.f32.mrb[0].mxu0
    %v2685 = vadd.f32 %v2525, %v2684
    %v2686 = vpop.f32.mrb[0].mxu0
    %2687 = vmatprep.mubr.bf16.mxu0 %v2465
    %2688 = vmatmul.mubr.bf16.gmra.mrb[0].mxu0 %v2464
    %v2689 = vpop.f32.mrb[0].mxu0
    %v2690 = vadd.f32 %v2525, %v2689
    %v2691 = vpop.f32.mrb[0].mxu0
    %v2692 = vpop.f32.mrb[0].mxu0
    %v2693 = vadd.f32 %v2525, %v2692
    %v2694 = vpop.f32.mrb[0].mxu0
    %2695 = vmatprep.mubr.bf16.mxu0 %v2467
    %2696 = vmatmul.mubr.bf16.gmra.mrb[0].mxu0 %v2466
    %v2697 = vpop.f32.mrb[0].mxu0
    %v2698 = vadd.f32 %v2525, %v2697
    %v2699 = vpop.f32.mrb[0].mxu0
    %v2700 = vpop.f32.mrb[0].mxu0
    %v2701 = vadd.f32 %v2525, %v2700
    %v2702 = vpop.f32.mrb[0].mxu0
    %2703 = vmatprep.mubr.bf16.mxu0 %v2469
    %2704 = vmatmul.mubr.bf16.gmra.mrb[0].mxu0 %v2468
    %v2705 = vpop.f32.mrb[0].mxu0
    %v2706 = vadd.f32 %v2525, %v2705
    %v2707 = vpop.f32.mrb[0].mxu0
    %v2708 = vpop.f32.mrb[0].mxu0
    %v2709 = vadd.f32 %v2525, %v2708
    %v2710 = vpop.f32.mrb[0].mxu0
    %2711 = vmatprep.mubr.bf16.mxu0 %v2471
    %2712 = vmatmul.mubr.bf16.gmra.mrb[0].mxu0 %v2470
    %v2713 = vpop.f32.mrb[0].mxu0
    %v2714 = vadd.f32 %v2525, %v2713
    %v2715 = vpop.f32.mrb[0].mxu0
    %v2716 = vpop.f32.mrb[0].mxu0
    %v2717 = vadd.f32 %v2525, %v2716
    %v2718 = vpop.f32.mrb[0].mxu0
    %2719 = vmatprep.mubr.bf16.mxu0 %v2473
    %2720 = vmatmul.mubr.bf16.gmra.mrb[0].mxu0 %v2472
    %v2721 = vpop.f32.mrb[0].mxu0
    %v2722 = vadd.f32 %v2525, %v2721
    %v2723 = vpop.f32.mrb[0].mxu0
    %v2724 = vpop.f32.mrb[0].mxu0
    %v2725 = vadd.f32 %v2525, %v2724
    %v2726 = vpop.f32.mrb[0].mxu0
    %2727 = vmatprep.mubr.bf16.mxu0 %v2475
    %2728 = vmatmul.mubr.bf16.gmra.mrb[0].mxu0 %v2474
    %v2729 = vpop.f32.mrb[0].mxu0
    %v2730 = vadd.f32 %v2525, %v2729
    %v2731 = vpop.f32.mrb[0].mxu0
    %v2732 = vpop.f32.mrb[0].mxu0
    %v2733 = vadd.f32 %v2525, %v2732
    %v2734 = vpop.f32.mrb[0].mxu0
    %2735 = vmatprep.mubr.bf16.mxu0 %v2477
    %2736 = vmatmul.mubr.bf16.gmra.mrb[0].mxu0 %v2476
    %v2737 = vpop.f32.mrb[0].mxu0
    %v2738 = vadd.f32 %v2525, %v2737
    %v2739 = vpop.f32.mrb[0].mxu0
    %v2740 = vpop.f32.mrb[0].mxu0
    %v2741 = vadd.f32 %v2525, %v2740
    %v2742 = vpop.f32.mrb[0].mxu0
    %2743 = vmatprep.mubr.bf16.mxu0 %v2479
    %2744 = vmatmul.mubr.bf16.gmra.mrb[0].mxu0 %v2478
    %v2745 = vpop.f32.mrb[0].mxu0
    %v2746 = vadd.f32 %v2525, %v2745
    %v2747 = vpop.f32.mrb[0].mxu0
    %v2748 = vpop.f32.mrb[0].mxu0
    %v2749 = vadd.f32 %v2525, %v2748
    %v2750 = vpop.f32.mrb[0].mxu0
    %2751 = vmatprep.mubr.bf16.mxu0 %v2481
    %2752 = vmatmul.mubr.bf16.gmra.mrb[0].mxu0 %v2480
    %v2753 = vpop.f32.mrb[0].mxu0
    %v2754 = vadd.f32 %v2525, %v2753
    %v2755 = vpop.f32.mrb[0].mxu0
    %v2756 = vpop.f32.mrb[0].mxu0
    %v2757 = vadd.f32 %v2525, %v2756
    %v2758 = vpop.f32.mrb[0].mxu0
    %2759 = vmatprep.mubr.bf16.mxu0 %v2483
    %2760 = vmatmul.mubr.bf16.gmra.mrb[0].mxu0 %v2482
    %v2761 = vpop.f32.mrb[0].mxu0
    %v2762 = vadd.f32 %v2525, %v2761
    %v2763 = vpop.f32.mrb[0].mxu0
    %v2764 = vpop.f32.mrb[0].mxu0
    %v2765 = vadd.f32 %v2525, %v2764
    %v2766 = vpop.f32.mrb[0].mxu0
    %2767 = vmatprep.mubr.bf16.mxu0 %v2485
    %2768 = vmatmul.mubr.bf16.gmra.mrb[0].mxu0 %v2484
    %v2769 = vpop.f32.mrb[0].mxu0
    %v2770 = vadd.f32 %v2525, %v2769
    %v2771 = vpop.f32.mrb[0].mxu0
    %v2772 = vpop.f32.mrb[0].mxu0
    %v2773 = vadd.f32 %v2525, %v2772
    %v2774 = vpop.f32.mrb[0].mxu0
    %2775 = vmatprep.mubr.bf16.mxu0 %v2487
    %2776 = vmatmul.mubr.bf16.gmra.mrb[0].mxu0 %v2486
    %v2777 = vpop.f32.mrb[0].mxu0
    %v2778 = vadd.f32 %v2525, %v2777
    %v2779 = vpop.f32.mrb[0].mxu0
    %v2780 = vpop.f32.mrb[0].mxu0
    %v2781 = vadd.f32 %v2525, %v2780
    %v2782 = vpop.f32.mrb[0].mxu0
    %2783 = vdwg.mxu0
    %2785 = vset.pattern.permute.xlu0 3
    %2786 = vperm.xlu0 %2785, %v101
    %v2787 = vpop.permute.xlu0 %2786
    %2790 = vset.pattern.permute.xlu0 3
    %2791 = vperm.xlu0 %2790, %v102
    %v2792 = vpop.permute.xlu0 %2791
    %2795 = vset.pattern.permute.xlu0 3
    %2796 = vperm.xlu0 %2795, %v103
    %v2797 = vpop.permute.xlu0 %2796
    %2800 = vset.pattern.permute.xlu0 3
    %2801 = vperm.xlu0 %2800, %v104
    %v2802 = vpop.permute.xlu0 %2801
    %2805 = vset.pattern.permute.xlu0 3
    %2806 = vperm.xlu0 %2805, %v105
    %v2807 = vpop.permute.xlu0 %2806
    %2810 = vset.pattern.permute.xlu0 3
    %2811 = vperm.xlu0 %2810, %v106
    %v2812 = vpop.permute.xlu0 %2811
    %2815 = vset.pattern.permute.xlu0 3
    %2816 = vperm.xlu0 %2815, %v107
    %v2817 = vpop.permute.xlu0 %2816
    %2820 = vset.pattern.permute.xlu0 3
    %2821 = vperm.xlu0 %2820, %v108
    %v2822 = vpop.permute.xlu0 %2821
    %2825 = vset.pattern.permute.xlu0 3
    %2826 = vperm.xlu0 %2825, %v109
    %v2827 = vpop.permute.xlu0 %2826
    %2830 = vset.pattern.permute.xlu0 3
    %2831 = vperm.xlu0 %2830, %v110
    %v2832 = vpop.permute.xlu0 %2831
    %2835 = vset.pattern.permute.xlu0 3
    %2836 = vperm.xlu0 %2835, %v111
    %v2837 = vpop.permute.xlu0 %2836
    %2840 = vset.pattern.permute.xlu0 3
    %2841 = vperm.xlu0 %2840, %v112
    %v2842 = vpop.permute.xlu0 %2841
    %2845 = vset.pattern.permute.xlu0 3
    %2846 = vperm.xlu0 %2845, %v113
    %v2847 = vpop.permute.xlu0 %2846
    %2850 = vset.pattern.permute.xlu0 3
    %2851 = vperm.xlu0 %2850, %v114
    %v2852 = vpop.permute.xlu0 %2851
    %2855 = vset.pattern.permute.xlu0 3
    %2856 = vperm.xlu0 %2855, %v115
    %v2857 = vpop.permute.xlu0 %2856
    %2860 = vset.pattern.permute.xlu0 3
    %2861 = vperm.xlu0 %2860, %v116
    %v2862 = vpop.permute.xlu0 %2861
    %2865 = vset.pattern.permute.xlu0 3
    %2866 = vperm.xlu0 %2865, %v117
    %v2867 = vpop.permute.xlu0 %2866
    %2870 = vset.pattern.permute.xlu0 3
    %2871 = vperm.xlu0 %2870, %v118
    %v2872 = vpop.permute.xlu0 %2871
    %2875 = vset.pattern.permute.xlu0 3
    %2876 = vperm.xlu0 %2875, %v119
    %v2877 = vpop.permute.xlu0 %2876
    %2880 = vset.pattern.permute.xlu0 3
    %2881 = vperm.xlu0 %2880, %v120
    %v2882 = vpop.permute.xlu0 %2881
    %2885 = vset.pattern.permute.xlu0 3
    %2886 = vperm.xlu0 %2885, %v121
    %v2887 = vpop.permute.xlu0 %2886
    %2890 = vset.pattern.permute.xlu0 3
    %2891 = vperm.xlu0 %2890, %v122
    %v2892 = vpop.permute.xlu0 %2891
    %2895 = vset.pattern.permute.xlu0 3
    %2896 = vperm.xlu0 %2895, %v123
    %v2897 = vpop.permute.xlu0 %2896
    %2900 = vset.pattern.permute.xlu0 3
    %2901 = vperm.xlu0 %2900, %v124
    %v2902 = vpop.permute.xlu0 %2901
    %2905 = vset.pattern.permute.xlu0 3
    %2906 = vperm.xlu0 %2905, %v125
    %v2907 = vpop.permute.xlu0 %2906
    %2910 = vset.pattern.permute.xlu0 3
    %2911 = vperm.xlu0 %2910, %v126
    %v2912 = vpop.permute.xlu0 %2911
    %2915 = vset.pattern.permute.xlu0 3
    %2916 = vperm.xlu0 %2915, %v127
    %v2917 = vpop.permute.xlu0 %2916
    %2920 = vset.pattern.permute.xlu0 3
    %2921 = vperm.xlu0 %2920, %v128
    %v2922 = vpop.permute.xlu0 %2921
    %2925 = vset.pattern.permute.xlu0 3
    %2926 = vperm.xlu0 %2925, %v129
    %v2927 = vpop.permute.xlu0 %2926
    %2930 = vset.pattern.permute.xlu0 3
    %2931 = vperm.xlu0 %2930, %v130
    %v2932 = vpop.permute.xlu0 %2931
    %2935 = vset.pattern.permute.xlu0 3
    %2936 = vperm.xlu0 %2935, %v131
    %v2937 = vpop.permute.xlu0 %2936
    %2940 = vset.pattern.permute.xlu0 3
    %2941 = vperm.xlu0 %2940, %v132
    %v2942 = vpop.permute.xlu0 %2941
    %v2944 = vmul.f32 %v2658, %v2787
    %v2945 = vmul.f32 %v2661, %v2792
    %v2946 = vmul.f32 %v2666, %v2797
    %v2947 = vmul.f32 %v2669, %v2802
    %v2948 = vmul.f32 %v2674, %v2807
    %v2949 = vmul.f32 %v2677, %v2812
    %v2950 = vmul.f32 %v2682, %v2817
    %v2951 = vmul.f32 %v2685, %v2822
    %v2952 = vmul.f32 %v2690, %v2827
    %v2953 = vmul.f32 %v2693, %v2832
    %v2954 = vmul.f32 %v2698, %v2837
    %v2955 = vmul.f32 %v2701, %v2842
    %v2956 = vmul.f32 %v2706, %v2847
    %v2957 = vmul.f32 %v2709, %v2852
    %v2958 = vmul.f32 %v2714, %v2857
    %v2959 = vmul.f32 %v2717, %v2862
    %v2960 = vmul.f32 %v2722, %v2867
    %v2961 = vmul.f32 %v2725, %v2872
    %v2962 = vmul.f32 %v2730, %v2877
    %v2963 = vmul.f32 %v2733, %v2882
    %v2964 = vmul.f32 %v2738, %v2887
    %v2965 = vmul.f32 %v2741, %v2892
    %v2966 = vmul.f32 %v2746, %v2897
    %v2967 = vmul.f32 %v2749, %v2902
    %v2968 = vmul.f32 %v2754, %v2907
    %v2969 = vmul.f32 %v2757, %v2912
    %v2970 = vmul.f32 %v2762, %v2917
    %v2971 = vmul.f32 %v2765, %v2922
    %v2972 = vmul.f32 %v2770, %v2927
    %v2973 = vmul.f32 %v2773, %v2932
    %v2974 = vmul.f32 %v2778, %v2937
    %v2975 = vmul.f32 %v2781, %v2942
    %2976 = vxpose.xlu0.b32.start [1/16] %v2944, 128
    %2977 = vxpose.xlu0.b32.cont [2/16] %v2945, 128
    %2978 = vxpose.xlu0.b32.cont [3/16] %v2946, 128
    %2979 = vxpose.xlu0.b32.cont [4/16] %v2947, 128
    %2980 = vxpose.xlu0.b32.cont [5/16] %v2948, 128
    %2981 = vxpose.xlu0.b32.cont [6/16] %v2949, 128
    %2982 = vxpose.xlu0.b32.cont [7/16] %v2950, 128
    %2983 = vxpose.xlu0.b32.cont [8/16] %v2951, 128
    %2984 = vxpose.xlu0.b32.cont [9/16] %v2952, 128
    %2985 = vxpose.xlu0.b32.cont [10/16] %v2953, 128
    %2986 = vxpose.xlu0.b32.cont [11/16] %v2954, 128
    %2987 = vxpose.xlu0.b32.cont [12/16] %v2955, 128
    %2988 = vxpose.xlu0.b32.cont [13/16] %v2956, 128
    %2989 = vxpose.xlu0.b32.cont [14/16] %v2957, 128
    %2990 = vxpose.xlu0.b32.cont [15/16] %v2958, 128
    %2991 = vxpose.xlu0.b32.end [16/16] %v2959, 128
    %v2992 = vpop.trf.xlu0
    %v2993 = vpop.trf.xlu0
    %v2994 = vpop.trf.xlu0
    %v2995 = vpop.trf.xlu0
    %v2996 = vpop.trf.xlu0
    %v2997 = vpop.trf.xlu0
    %v2998 = vpop.trf.xlu0
    %v2999 = vpop.trf.xlu0
    %v3000 = vpop.trf.xlu0
    %v3001 = vpop.trf.xlu0
    %v3002 = vpop.trf.xlu0
    %v3003 = vpop.trf.xlu0
    %v3004 = vpop.trf.xlu0
    %v3005 = vpop.trf.xlu0
    %v3006 = vpop.trf.xlu0
    %v3007 = vpop.trf.xlu0
    %3008 = vxpose.xlu0.b32.start [1/16] %v2960, 128
    %3009 = vxpose.xlu0.b32.cont [2/16] %v2961, 128
    %3010 = vxpose.xlu0.b32.cont [3/16] %v2962, 128
    %3011 = vxpose.xlu0.b32.cont [4/16] %v2963, 128
    %3012 = vxpose.xlu0.b32.cont [5/16] %v2964, 128
    %3013 = vxpose.xlu0.b32.cont [6/16] %v2965, 128
    %3014 = vxpose.xlu0.b32.cont [7/16] %v2966, 128
    %3015 = vxpose.xlu0.b32.cont [8/16] %v2967, 128
    %3016 = vxpose.xlu0.b32.cont [9/16] %v2968, 128
    %3017 = vxpose.xlu0.b32.cont [10/16] %v2969, 128
    %3018 = vxpose.xlu0.b32.cont [11/16] %v2970, 128
    %3019 = vxpose.xlu0.b32.cont [12/16] %v2971, 128
    %3020 = vxpose.xlu0.b32.cont [13/16] %v2972, 128
    %3021 = vxpose.xlu0.b32.cont [14/16] %v2973, 128
    %3022 = vxpose.xlu0.b32.cont [15/16] %v2974, 128
    %3023 = vxpose.xlu0.b32.end [16/16] %v2975, 128
    %v3024 = vpop.trf.xlu0
    %v3025 = vpop.trf.xlu0
    %v3026 = vpop.trf.xlu0
    %v3027 = vpop.trf.xlu0
    %v3028 = vpop.trf.xlu0
    %v3029 = vpop.trf.xlu0
    %v3030 = vpop.trf.xlu0
    %v3031 = vpop.trf.xlu0
    %v3032 = vpop.trf.xlu0
    %v3033 = vpop.trf.xlu0
    %v3034 = vpop.trf.xlu0
    %v3035 = vpop.trf.xlu0
    %v3036 = vpop.trf.xlu0
    %v3037 = vpop.trf.xlu0
    %v3038 = vpop.trf.xlu0
    %v3039 = vpop.trf.xlu0
    %v3040 = vpack.c.bf16 %v2992, %v2992
    %v3041 = vpack.c.bf16 %v3024, %v3024
    %v3044 = vunpack.c.l.b16 %v3040
    %v3045 = vunpack.c.l.b16 %v3041
    %v3046 = vpack.c.b16 %v3045, %v3044
    %3048 = vst [vmem:[#allocation10] sm:$0xff] %v3046
    // Predicated region
    $region70: #{tpu_custom_call.1} parent=1 // pred_check
      _
    $region71: #{tpu_custom_call.1} parent=1 // pred_check_branch
      %3050 = sbr.rel (0) target = $region73
    $region72: #{tpu_custom_call.1} parent=1 // pred_region
      %s3052 = ssub.s32 128, 128
      %3053 = vsyncadd [#allocation4], %s3052
      %s3055 = sshll.u32 [#allocation10], 4
      %s3056 = int_to_ptr.vmem [resolvable:$true] %s3055
      %3058 = dma.vmem_to_hbm [thread:$0]  %s3056, 128, %s13, [#allocation4]
    $region73: #{tpu_custom_call.1} parent=1 // pred_fallthru
      _
    // Predicated region
    $region74: #{tpu_custom_call.1} parent=1 // pred_check
      _
    $region75: #{tpu_custom_call.1} parent=1 // pred_check_branch
      %3060 = sbr.rel (0) target = $region77
    $region76: #{tpu_custom_call.1} parent=1 // pred_region
      %3061 = dma.done [#allocation4], 128
    $region77: #{tpu_custom_call.1} parent=1 // pred_fallthru
      _
    %3062 = vsyncpa [#allocation3], 1
    %3063 = vsyncpa [#allocation6], 1
    %3064 = vsyncpa [#allocation9], 1
    %3065 = vsyncpa [#allocation4], 1

</llo_original>
